<compile_context>
chip_gen: v5e
topology: v5e:2x2
jax: 0.10.0
libtpu: 0.0.40
codegen_flags: <defaults>
</compile_context>

<pallas_src>
import functools

import jax
import jax.numpy as jnp
from jax.experimental import pallas as pl
from jax.experimental.pallas import tpu as pltpu

BN_EPS = 1e-5
F32_BYTES = 4


# ----------------------------- Pallas kernels ------------------------------

def _write_stats(s_ref, acc, cout):
    """Per-block complex-BN partial sums (exact, no padded rows):
    rows = [sum_r|sum_i], [sum_r^2|sum_i^2], [sum_{r*i}|sum_{r*i}]."""
    yr = acc[:, :cout]
    yi = acc[:, cout:]
    s0 = jnp.sum(acc, axis=0, keepdims=True)
    s1 = jnp.sum(acc * acc, axis=0, keepdims=True)
    cr = jnp.sum(yr * yi, axis=0, keepdims=True)
    s_ref[...] = jnp.concatenate(
        [s0, s1, jnp.concatenate([cr, cr], axis=-1)], axis=0)


def _conv1_kernel(pee_ref, peo_ref, poe_ref, poo_ref, w_ref, y_ref, s_ref, *,
                  nb, cin, cout, ho, wo):
    """Stride-2 3x3 complex conv + BN partial stats, nb images per step.

    Inputs are the 4 row/col parity planes of the replicate-padded image so
    every tap is a contiguous static slice.  All 9 taps are concatenated along
    K (in-VMEM im2col, K = 18*cin) and fed to a single MXU dot.
    Channel layout everywhere: last dim = [real channels | imag channels].
    """
    planes = ((pee_ref[...], peo_ref[...]),
              (poe_ref[...], poo_ref[...]))
    taps = []
    for ky in range(3):
        for kx in range(3):
            p = planes[ky % 2][kx % 2]
            v = p[:, ky // 2:ky // 2 + ho, kx // 2:kx // 2 + wo, :]
            taps.append(v.reshape(nb * ho * wo, 2 * cin))
    slab = jnp.concatenate(taps, axis=-1)                      # (M, 18*cin)
    acc = jnp.dot(slab, w_ref[...], preferred_element_type=jnp.float32)
    y_ref[...] = acc.reshape(nb, ho, wo, 2 * cout)
    _write_stats(s_ref, acc, cout)


def _conv2_kernel(a_ref, b_ref, x_ref, w_ref, y_ref, s_ref, *,
                  nb, c1, c2, ho, wo):
    """Fused: stage-1 BN affine (small MXU matmul) + CReLU -> replicate pad
    built in VMEM -> stride-1 3x3 complex conv (single K=18*c1 dot) ->
    BN partial stats."""
    x = x_ref[...].reshape(nb * ho * wo, 2 * c1)
    z = jnp.dot(x, a_ref[...], preferred_element_type=jnp.float32) + b_ref[...]
    z = jnp.maximum(z, 0.0).reshape(nb, ho, wo, 2 * c1)
    # replicate pad (per image) in VMEM — avoids an HBM round trip via jnp.pad
    zp = jnp.concatenate([z[:, :, 0:1, :], z, z[:, :, wo - 1:wo, :]], axis=2)
    zp = jnp.concatenate([zp[:, 0:1], zp, zp[:, ho - 1:ho]], axis=1)
    taps = []
    for ky in range(3):
        for kx in range(3):
            v = zp[:, ky:ky + ho, kx:kx + wo, :]
            taps.append(v.reshape(nb * ho * wo, 2 * c1))
    slab = jnp.concatenate(taps, axis=-1)                      # (M, 18*c1)
    acc = jnp.dot(slab, w_ref[...], preferred_element_type=jnp.float32)
    y_ref[...] = acc.reshape(nb, ho, wo, 2 * c2)
    _write_stats(s_ref, acc, c2)


def _bn_act_kernel(a_ref, b_ref, y_ref, o_ref, *, nb, c, ho, wo):
    """Final complex BN (folded per-channel 2x2 affine applied as a small MXU
    matmul — no half-lane slices / lane concats) + CReLU."""
    y = y_ref[...].reshape(nb * ho * wo, 2 * c)
    z = jnp.dot(y, a_ref[...], preferred_element_type=jnp.float32) + b_ref[...]
    o_ref[...] = jnp.maximum(z, 0.0).reshape(nb, ho, wo, 2 * c)


# ------------------------------ kernel wrappers -----------------------------

def _conv1(planes, w_cat, *, nb, cin, cout, ho, wo, vmem):
    pee, peo, poe, poo = planes
    n = pee.shape[0]
    nblk = n // nb
    hp, wp = ho + 1, wo + 1
    plane_spec = pl.BlockSpec((nb, hp, wp, 2 * cin), lambda i: (i, 0, 0, 0))
    kern = functools.partial(_conv1_kernel, nb=nb, cin=cin, cout=cout,
                             ho=ho, wo=wo)
    return pl.pallas_call(
        kern,
        out_shape=(jax.ShapeDtypeStruct((n, ho, wo, 2 * cout), jnp.float32),
                   jax.ShapeDtypeStruct((nblk, 3, 2 * cout), jnp.float32)),
        grid=(nblk,),
        in_specs=[plane_spec, plane_spec, plane_spec, plane_spec,
                  pl.BlockSpec((18 * cin, 2 * cout), lambda i: (0, 0))],
        out_specs=(pl.BlockSpec((nb, ho, wo, 2 * cout), lambda i: (i, 0, 0, 0)),
                   pl.BlockSpec((None, 3, 2 * cout), lambda i: (i, 0, 0))),
        compiler_params=pltpu.CompilerParams(
            dimension_semantics=("parallel",), vmem_limit_bytes=vmem),
    )(pee, peo, poe, poo, w_cat)


def _conv2(y1, w_cat, a_mat, a_bias, *, nb, c1, c2, ho, wo, vmem):
    n = y1.shape[0]
    nblk = n // nb
    kern = functools.partial(_conv2_kernel, nb=nb, c1=c1, c2=c2, ho=ho, wo=wo)
    return pl.pallas_call(
        kern,
        out_shape=(jax.ShapeDtypeStruct((n, ho, wo, 2 * c2), jnp.float32),
                   jax.ShapeDtypeStruct((nblk, 3, 2 * c2), jnp.float32)),
        grid=(nblk,),
        in_specs=[pl.BlockSpec((2 * c1, 2 * c1), lambda i: (0, 0)),
                  pl.BlockSpec((1, 2 * c1), lambda i: (0, 0)),
                  pl.BlockSpec((nb, ho, wo, 2 * c1), lambda i: (i, 0, 0, 0)),
                  pl.BlockSpec((18 * c1, 2 * c2), lambda i: (0, 0))],
        out_specs=(pl.BlockSpec((nb, ho, wo, 2 * c2), lambda i: (i, 0, 0, 0)),
                   pl.BlockSpec((None, 3, 2 * c2), lambda i: (i, 0, 0))),
        compiler_params=pltpu.CompilerParams(
            dimension_semantics=("parallel",), vmem_limit_bytes=vmem),
    )(a_mat, a_bias, y1, w_cat)


def _bn_act(y, a_mat, a_bias, *, nb, c, ho, wo, vmem):
    n = y.shape[0]
    nblk = n // nb
    kern = functools.partial(_bn_act_kernel, nb=nb, c=c, ho=ho, wo=wo)
    return pl.pallas_call(
        kern,
        out_shape=jax.ShapeDtypeStruct((n, ho, wo, 2 * c), jnp.float32),
        grid=(nblk,),
        in_specs=[pl.BlockSpec((2 * c, 2 * c), lambda i: (0, 0)),
                  pl.BlockSpec((1, 2 * c), lambda i: (0, 0)),
                  pl.BlockSpec((nb, ho, wo, 2 * c), lambda i: (i, 0, 0, 0))],
        out_specs=pl.BlockSpec((nb, ho, wo, 2 * c), lambda i: (i, 0, 0, 0)),
        compiler_params=pltpu.CompilerParams(
            dimension_semantics=("parallel",), vmem_limit_bytes=vmem),
    )(a_mat, a_bias, y)


# --------------------------------- glue -------------------------------------

def _plan(n, cin, c1, c2, ho, wo):
    """Choose images-per-grid-step (nb) and a VMEM limit from actual shapes.

    Targets: per-step streamed+temp footprint <= ~12 MiB (safe on v7x's 64 MiB
    VMEM with double-buffering and the default 32 MiB scoped limit), and a dot
    M-dim of ~2k rows so small images amortize the ~0.35us/step overhead.
    """
    s1 = (4 * (ho + 1) * (wo + 1) * 2 * cin
          + ho * wo * (18 * cin + 4 * c1)) * F32_BYTES
    s2 = ((ho + 2) * (wo + 2) * 2 * c1
          + ho * wo * (2 * c1 + 18 * c1 + 4 * c2)) * F32_BYTES
    s3 = 4 * ho * wo * 2 * c2 * F32_BYTES
    per_img = max(s1, s2, s3)

    budget = 12 << 20
    m_target = 2048
    cap = max(1, min(budget // max(per_img, 1), max(1, m_target // (ho * wo))))
    nb = 1
    for d in range(1, n + 1):
        if n % d == 0 and d <= cap:
            nb = d
    vmem = int(min(64 << 20, max(32 << 20, 2 * nb * per_img + (8 << 20))))
    return nb, vmem


def _build_wcat(wr, wi):
    """(Cout, Cin, 3, 3) real/imag -> (18*Cin, 2*Cout) K-fused im2col weight.
    Per tap the rows are [[Wr, Wi], [-Wi, Wr]] so [xr|xi] @ W_tap = [yr|yi];
    taps stacked along K in ky-major / kx-minor order (matches the slab)."""
    cout, cin = wr.shape[0], wr.shape[1]
    wr_t = jnp.transpose(wr, (2, 3, 1, 0)).reshape(9, cin, cout)
    wi_t = jnp.transpose(wi, (2, 3, 1, 0)).reshape(9, cin, cout)
    top = jnp.concatenate([wr_t, wi_t], axis=-1)     # rows multiplying x_r
    bot = jnp.concatenate([-wi_t, wr_t], axis=-1)    # rows multiplying x_i
    w = jnp.concatenate([top, bot], axis=1)          # (9, 2*cin, 2*cout)
    return w.reshape(18 * cin, 2 * cout).astype(jnp.float32)


def _fold_bn_affine(stats, bn_p, m_total):
    """Reduce per-block partial sums (nblk, 3, 2C) and fold whitening +
    (gamma, beta) into a per-channel affine, returned as a (2C, 2C) matrix and
    a (1, 2C) bias so kernels can apply it as [xr|xi] @ A + b."""
    c = bn_p.shape[1]
    tot = jnp.sum(stats, axis=0)
    inv_m = 1.0 / m_total
    mu_r = tot[0, :c] * inv_m
    mu_i = tot[0, c:] * inv_m
    vrr = tot[1, :c] * inv_m - mu_r * mu_r + BN_EPS
    vii = tot[1, c:] * inv_m - mu_i * mu_i + BN_EPS
    vri = tot[2, :c] * inv_m - mu_r * mu_i
    s = jnp.sqrt(vrr * vii - vri * vri)
    t = jnp.sqrt(vrr + vii + 2.0 * s)
    inv_st = 1.0 / (s * t)
    wrr = (vii + s) * inv_st
    wii = (vrr + s) * inv_st
    wri = -vri * inv_st
    grr, gri, gii = bn_p[0], bn_p[1], bn_p[2]
    beta_r, beta_i = bn_p[3], bn_p[4]
    arr_ = grr * wrr + gri * wri
    ari = grr * wri + gri * wii
    air = gri * wrr + gii * wri
    aii = gri * wri + gii * wii
    b_r = beta_r - (arr_ * mu_r + ari * mu_i)
    b_i = beta_i - (air * mu_r + aii * mu_i)
    a_mat = jnp.concatenate(
        [jnp.concatenate([jnp.diag(arr_), jnp.diag(air)], axis=1),
         jnp.concatenate([jnp.diag(ari), jnp.diag(aii)], axis=1)], axis=0)
    a_bias = jnp.concatenate([b_r, b_i])[None, :]
    return a_mat.astype(jnp.float32), a_bias.astype(jnp.float32)


def down_forward(x, params):
    """x: complex64 NCHW -> complex64 NCHW with spatial dims halved."""
    n, cin, h, w = x.shape
    assert h % 2 == 0 and w % 2 == 0, "Down kernel expects even spatial dims"
    c1 = params["w1r"].shape[0]
    c2 = params["w2r"].shape[0]
    ho, wo = h // 2, w // 2

    nb, vmem = _plan(n, cin, c1, c2, ho, wo)

    # NCHW complex -> NHWC float32 with channel layout [real | imag].
    xcat = jnp.concatenate([jnp.real(x), jnp.imag(x)], axis=1).astype(jnp.float32)
    x_nhwc = jnp.transpose(xcat, (0, 2, 3, 1))                 # (N, H, W, 2*cin)

    # Replicate pad + 4 row/col parity planes (ee, eo, oe, oo) for the
    # stride-2 stage: every tap becomes a contiguous static slice in-kernel.
    xp = jnp.pad(x_nhwc, ((0, 0), (1, 1), (1, 1), (0, 0)), mode="edge")
    planes = (xp[:, 0::2, 0::2, :], xp[:, 0::2, 1::2, :],
              xp[:, 1::2, 0::2, :], xp[:, 1::2, 1::2, :])

    # ---- stage 1: stride-2 conv + BN partial stats ----
    w1 = _build_wcat(params["w1r"], params["w1i"])
    y1, st1 = _conv1(planes, w1, nb=nb, cin=cin, cout=c1, ho=ho, wo=wo, vmem=vmem)
    a1, b1 = _fold_bn_affine(st1, params["bn1"], n * ho * wo)

    # ---- stage 2: stage-1 BN+CReLU + replicate pad fused into stride-1 conv ----
    w2 = _build_wcat(params["w2r"], params["w2i"])
    y2, st2 = _conv2(y1, w2, a1, b1, nb=nb, c1=c1, c2=c2, ho=ho, wo=wo, vmem=vmem)
    a2, b2 = _fold_bn_affine(st2, params["bn2"], n * ho * wo)

    # ---- final BN + CReLU (one elementwise pass) ----
    z = _bn_act(y2, a2, b2, nb=nb, c=c2, ho=ho, wo=wo, vmem=vmem)  # (N,ho,wo,2*c2)

    # Repack (slice real/imag, NHWC->NCHW, complex): single fused XLA pass.
    zr = z[..., :c2]
    zi = z[..., c2:]
    out = jax.lax.complex(zr, zi)
    return jnp.transpose(out, (0, 3, 1, 2))


# --------------------------- pure-JAX reference ------------------------------

def _extract_patches(x, stride):
    n, h, w, c = x.shape
    ho = (h - 1) // stride + 1
    wo = (w - 1) // stride + 1
    xp = jnp.pad(x, ((0, 0), (1, 1), (1, 1), (0, 0)), mode="edge")
    cols = []
    for ky in range(3):
        for kx in range(3):
            cols.append(xp[:, ky:ky + stride * (ho - 1) + 1:stride,
                           kx:kx + stride * (wo - 1) + 1:stride, :])
    p = jnp.stack(cols, axis=3)
    return p.reshape(n * ho * wo, 9 * c), (n, ho, wo)


def _weight_matrix(w):
    cout = w.shape[0]
    return jnp.transpose(w, (2, 3, 1, 0)).reshape(-1, cout)


def _bn_crelu_ref(xr, xi, p):
    mu_r = xr.mean(0, keepdims=True)
    mu_i = xi.mean(0, keepdims=True)
    cr, ci = xr - mu_r, xi - mu_i
    vrr = (cr * cr).mean(0, keepdims=True) + BN_EPS
    vii = (ci * ci).mean(0, keepdims=True) + BN_EPS
    vri = (cr * ci).mean(0, keepdims=True)
    s = jnp.sqrt(vrr * vii - vri * vri)
    t = jnp.sqrt(vrr + vii + 2.0 * s)
    inv_st = 1.0 / (s * t)
    wrr, wii, wri = (vii + s) * inv_st, (vrr + s) * inv_st, -vri * inv_st
    xh_r = wrr * cr + wri * ci
    xh_i = wri * cr + wii * ci
    grr, gri, gii, br, bi = p[0:1], p[1:2], p[2:3], p[3:4], p[4:5]
    yr = grr * xh_r + gri * xh_i + br
    yi = gri * xh_r + gii * xh_i + bi
    return jnp.maximum(yr, 0.0), jnp.maximum(yi, 0.0)


def _stage_ref(xr, xi, wr, wi, bn_p, stride):
    cout = wr.shape[0]
    pr, shp = _extract_patches(xr, stride)
    pi, _ = _extract_patches(xi, stride)
    wmr, wmi = _weight_matrix(wr), _weight_matrix(wi)
    yr = pr @ wmr - pi @ wmi
    yi = pr @ wmi + pi @ wmr
    yr, yi = _bn_crelu_ref(yr, yi, bn_p)
    n, ho, wo = shp
    return yr.reshape(n, ho, wo, cout), yi.reshape(n, ho, wo, cout)


def down_forward_ref(x, params):
    xr = jnp.transpose(jnp.real(x), (0, 2, 3, 1)).astype(jnp.float32)
    xi = jnp.transpose(jnp.imag(x), (0, 2, 3, 1)).astype(jnp.float32)
    xr, xi = _stage_ref(xr, xi, params["w1r"], params["w1i"], params["bn1"], 2)
    xr, xi = _stage_ref(xr, xi, params["w2r"], params["w2i"], params["bn2"], 1)
    y = xr + 1j * xi
    return jnp.transpose(y, (0, 3, 1, 2)).astype(jnp.complex64)


# --------------------------------- params ------------------------------------

def init_params(key, in_ch, out_ch):
    mid = out_ch
    k1, k2, k3, k4 = jax.random.split(key, 4)
    sc1 = (3 * 3 * in_ch) ** -0.5
    sc2 = (3 * 3 * mid) ** -0.5

    def bn_p(c):
        g = 1.0 / jnp.sqrt(2.0)
        p = jnp.zeros((5, c), jnp.float32)
        return p.at[0].set(g).at[2].set(g)   # gamma = I/sqrt(2); gri = beta = 0

    return dict(
        w1r=sc1 * jax.random.normal(k1, (mid, in_ch, 3, 3), jnp.float32),
        w1i=sc1 * jax.random.normal(k2, (mid, in_ch, 3, 3), jnp.float32),
        w2r=sc2 * jax.random.normal(k3, (out_ch, mid, 3, 3), jnp.float32),
        w2i=sc2 * jax.random.normal(k4, (out_ch, mid, 3, 3), jnp.float32),
        bn1=bn_p(mid),
        bn2=bn_p(out_ch),
    )


# ----------------------------------- main -------------------------------------

if __name__ == "__main__":
    key = jax.random.PRNGKey(0)
    kx, kxi, kp = jax.random.split(key, 3)

    N, Cin, H, W = 2, 4, 16, 16
    Cout = 8

    xr0 = jax.random.normal(kx, (N, Cin, H, W), jnp.float32)
    xi0 = jax.random.normal(kxi, (N, Cin, H, W), jnp.float32)
    x = (xr0 + 1j * xi0).astype(jnp.complex64)

    params = init_params(kp, Cin, Cout)

    down = jax.jit(down_forward)
    out = jax.block_until_ready(down(x, params))
    assert out.shape == (N, Cout, H // 2, W // 2), out.shape
    assert out.dtype == jnp.complex64, out.dtype

    ref = jax.block_until_ready(down_forward_ref(x, params))
    assert jnp.allclose(out, ref, atol=1e-4, rtol=1e-3), "mismatch vs JAX reference"

    print("KERNEL_OK")
</pallas_src>

<mosaic_0001>
module attributes {stable_mosaic.version = 11 : i64} {
  func.func @_conv1_kernel(%arg0: i32, %arg1: memref<2x9x9x8xf32, #tpu.memory_space<vmem>>, %arg2: memref<2x9x9x8xf32, #tpu.memory_space<vmem>>, %arg3: memref<2x9x9x8xf32, #tpu.memory_space<vmem>>, %arg4: memref<2x9x9x8xf32, #tpu.memory_space<vmem>>, %arg5: memref<72x16xf32, #tpu.memory_space<vmem>>, %arg6: memref<2x8x8x16xf32, #tpu.memory_space<vmem>>, %arg7: memref<1x3x16xf32, #tpu.memory_space<vmem>>) attributes {dimension_semantics = [#tpu.dimension_semantics<parallel>], iteration_bounds = array<i64: 1>, scalar_prefetch = 0 : i64, scratch_operands = 0 : i64, tpu.core_type = #tpu.core_type<tc>, window_params = [{transform_indices = @transform_0, window_bounds = array<i64: 2, 9, 9, 8>}, {transform_indices = @transform_1, window_bounds = array<i64: 2, 9, 9, 8>}, {transform_indices = @transform_2, window_bounds = array<i64: 2, 9, 9, 8>}, {transform_indices = @transform_3, window_bounds = array<i64: 2, 9, 9, 8>}, {pipeline_mode = #tpu.pipeline_mode<synchronous>, transform_indices = @transform_4, window_bounds = array<i64: 72, 16>}, {transform_indices = @transform_5, window_bounds = array<i64: 2, 8, 8, 16>}, {transform_indices = @transform_6, window_bounds = array<i64: 1, 3, 16>}]} {
    %c0 = arith.constant 0 : index
    %c0_0 = arith.constant 0 : index
    %c0_1 = arith.constant 0 : index
    %c0_2 = arith.constant 0 : index
    %0 = vector.load %arg1[%c0, %c0_0, %c0_1, %c0_2] : memref<2x9x9x8xf32, #tpu.memory_space<vmem>>, vector<2x9x9x8xf32>
    %c0_3 = arith.constant 0 : index
    %c0_4 = arith.constant 0 : index
    %c0_5 = arith.constant 0 : index
    %c0_6 = arith.constant 0 : index
    %1 = vector.load %arg2[%c0_3, %c0_4, %c0_5, %c0_6] : memref<2x9x9x8xf32, #tpu.memory_space<vmem>>, vector<2x9x9x8xf32>
    %c0_7 = arith.constant 0 : index
    %c0_8 = arith.constant 0 : index
    %c0_9 = arith.constant 0 : index
    %c0_10 = arith.constant 0 : index
    %2 = vector.load %arg3[%c0_7, %c0_8, %c0_9, %c0_10] : memref<2x9x9x8xf32, #tpu.memory_space<vmem>>, vector<2x9x9x8xf32>
    %c0_11 = arith.constant 0 : index
    %c0_12 = arith.constant 0 : index
    %c0_13 = arith.constant 0 : index
    %c0_14 = arith.constant 0 : index
    %3 = vector.load %arg4[%c0_11, %c0_12, %c0_13, %c0_14] : memref<2x9x9x8xf32, #tpu.memory_space<vmem>>, vector<2x9x9x8xf32>
    %4 = vector.extract_strided_slice %0 {offsets = [0, 0, 0, 0], sizes = [2, 8, 8, 8], strides = [1, 1, 1, 1]} : vector<2x9x9x8xf32> to vector<2x8x8x8xf32>
    %5 = vector.shape_cast %4 : vector<2x8x8x8xf32> to vector<128x8xf32>
    %6 = vector.extract_strided_slice %1 {offsets = [0, 0, 0, 0], sizes = [2, 8, 8, 8], strides = [1, 1, 1, 1]} : vector<2x9x9x8xf32> to vector<2x8x8x8xf32>
    %7 = vector.shape_cast %6 : vector<2x8x8x8xf32> to vector<128x8xf32>
    %8 = vector.extract_strided_slice %0 {offsets = [0, 0, 1, 0], sizes = [2, 8, 8, 8], strides = [1, 1, 1, 1]} : vector<2x9x9x8xf32> to vector<2x8x8x8xf32>
    %9 = vector.shape_cast %8 : vector<2x8x8x8xf32> to vector<128x8xf32>
    %10 = vector.extract_strided_slice %2 {offsets = [0, 0, 0, 0], sizes = [2, 8, 8, 8], strides = [1, 1, 1, 1]} : vector<2x9x9x8xf32> to vector<2x8x8x8xf32>
    %11 = vector.shape_cast %10 : vector<2x8x8x8xf32> to vector<128x8xf32>
    %12 = vector.extract_strided_slice %3 {offsets = [0, 0, 0, 0], sizes = [2, 8, 8, 8], strides = [1, 1, 1, 1]} : vector<2x9x9x8xf32> to vector<2x8x8x8xf32>
    %13 = vector.shape_cast %12 : vector<2x8x8x8xf32> to vector<128x8xf32>
    %14 = vector.extract_strided_slice %2 {offsets = [0, 0, 1, 0], sizes = [2, 8, 8, 8], strides = [1, 1, 1, 1]} : vector<2x9x9x8xf32> to vector<2x8x8x8xf32>
    %15 = vector.shape_cast %14 : vector<2x8x8x8xf32> to vector<128x8xf32>
    %16 = vector.extract_strided_slice %0 {offsets = [0, 1, 0, 0], sizes = [2, 8, 8, 8], strides = [1, 1, 1, 1]} : vector<2x9x9x8xf32> to vector<2x8x8x8xf32>
    %17 = vector.shape_cast %16 : vector<2x8x8x8xf32> to vector<128x8xf32>
    %18 = vector.extract_strided_slice %1 {offsets = [0, 1, 0, 0], sizes = [2, 8, 8, 8], strides = [1, 1, 1, 1]} : vector<2x9x9x8xf32> to vector<2x8x8x8xf32>
    %19 = vector.shape_cast %18 : vector<2x8x8x8xf32> to vector<128x8xf32>
    %20 = vector.extract_strided_slice %0 {offsets = [0, 1, 1, 0], sizes = [2, 8, 8, 8], strides = [1, 1, 1, 1]} : vector<2x9x9x8xf32> to vector<2x8x8x8xf32>
    %21 = vector.shape_cast %20 : vector<2x8x8x8xf32> to vector<128x8xf32>
    %22 = tpu.concatenate %5, %7, %9, %11, %13, %15, %17, %19, %21 in 1 : vector<128x8xf32>, vector<128x8xf32>, vector<128x8xf32>, vector<128x8xf32>, vector<128x8xf32>, vector<128x8xf32>, vector<128x8xf32>, vector<128x8xf32>, vector<128x8xf32> -> vector<128x72xf32>
    %c0_15 = arith.constant 0 : index
    %c0_16 = arith.constant 0 : index
    %23 = vector.load %arg5[%c0_15, %c0_16] : memref<72x16xf32, #tpu.memory_space<vmem>>, vector<72x16xf32>
    %cst = arith.constant dense<0.000000e+00> : vector<128x16xf32>
    %24 = tpu.matmul %22, %23, %cst {dimension_numbers = #tpu.dot_dimension_numbers<[1], [0], [0], [1], [0, 0, 1, 1], [], []>} : vector<128x72xf32>, vector<72x16xf32>, vector<128x16xf32> -> vector<128x16xf32>
    %25 = vector.shape_cast %24 : vector<128x16xf32> to vector<2x8x8x16xf32>
    %c0_17 = arith.constant 0 : index
    %c0_18 = arith.constant 0 : index
    %c0_19 = arith.constant 0 : index
    %c0_20 = arith.constant 0 : index
    %26 = vector.load %arg6[%c0_17, %c0_18, %c0_19, %c0_20] : memref<2x8x8x16xf32, #tpu.memory_space<vmem>>, vector<2x8x8x16xf32>
    tpu.vector_store %arg6[%c0_17, %c0_18, %c0_19, %c0_20], %25 {strides = array<i32>} : memref<2x8x8x16xf32, #tpu.memory_space<vmem>>, vector<2x8x8x16xf32>,
    %27 = vector.extract_strided_slice %24 {offsets = [0, 0], sizes = [128, 8], strides = [1, 1]} : vector<128x16xf32> to vector<128x8xf32>
    %28 = vector.extract_strided_slice %24 {offsets = [0, 8], sizes = [128, 8], strides = [1, 1]} : vector<128x16xf32> to vector<128x8xf32>
    %cst_21 = arith.constant dense<0.000000e+00> : vector<16xf32>
    %29 = vector.multi_reduction <add>, %24, %cst_21 [0] : vector<128x16xf32> to vector<16xf32>
    %30 = vector.shape_cast %29 : vector<16xf32> to vector<1x16xf32>
    %31 = arith.mulf %24, %24 : vector<128x16xf32>
    %cst_22 = arith.constant dense<0.000000e+00> : vector<16xf32>
    %32 = vector.multi_reduction <add>, %31, %cst_22 [0] : vector<128x16xf32> to vector<16xf32>
    %33 = vector.shape_cast %32 : vector<16xf32> to vector<1x16xf32>
    %34 = arith.mulf %27, %28 : vector<128x8xf32>
    %cst_23 = arith.constant dense<0.000000e+00> : vector<8xf32>
    %35 = vector.multi_reduction <add>, %34, %cst_23 [0] : vector<128x8xf32> to vector<8xf32>
    %36 = vector.shape_cast %35 : vector<8xf32> to vector<1x8xf32>
    %37 = tpu.concatenate %36, %36 in 1 : vector<1x8xf32>, vector<1x8xf32> -> vector<1x16xf32>
    %38 = tpu.concatenate %30, %33, %37 in 0 : vector<1x16xf32>, vector<1x16xf32>, vector<1x16xf32> -> vector<3x16xf32>
    %c0_24 = arith.constant 0 : index
    %c0_25 = arith.constant 0 : index
    %c0_26 = arith.constant 0 : index
    %39 = vector.load %arg7[%c0_24, %c0_25, %c0_26] : memref<1x3x16xf32, #tpu.memory_space<vmem>>, vector<1x3x16xf32>
    %40 = vector.shape_cast %39 : vector<1x3x16xf32> to vector<3x16xf32>
    %41 = vector.shape_cast %38 : vector<3x16xf32> to vector<1x3x16xf32>
    tpu.vector_store %arg7[%c0_24, %c0_25, %c0_26], %41 {strides = array<i32>} : memref<1x3x16xf32, #tpu.memory_space<vmem>>, vector<1x3x16xf32>,
    return
  }
  func.func @transform_0(%arg0: i32) -> (i32, i32, i32, i32) {
    %c0_i32 = arith.constant 0 : i32
    %c0_i32_0 = arith.constant 0 : i32
    %c0_i32_1 = arith.constant 0 : i32
    %c0_i32_2 = arith.constant 0 : i32
    return %arg0, %c0_i32, %c0_i32_0, %c0_i32_1 : i32, i32, i32, i32
  }
  func.func @transform_1(%arg0: i32) -> (i32, i32, i32, i32) {
    %c0_i32 = arith.constant 0 : i32
    %c0_i32_0 = arith.constant 0 : i32
    %c0_i32_1 = arith.constant 0 : i32
    %c0_i32_2 = arith.constant 0 : i32
    return %arg0, %c0_i32, %c0_i32_0, %c0_i32_1 : i32, i32, i32, i32
  }
  func.func @transform_2(%arg0: i32) -> (i32, i32, i32, i32) {
    %c0_i32 = arith.constant 0 : i32
    %c0_i32_0 = arith.constant 0 : i32
    %c0_i32_1 = arith.constant 0 : i32
    %c0_i32_2 = arith.constant 0 : i32
    return %arg0, %c0_i32, %c0_i32_0, %c0_i32_1 : i32, i32, i32, i32
  }
  func.func @transform_3(%arg0: i32) -> (i32, i32, i32, i32) {
    %c0_i32 = arith.constant 0 : i32
    %c0_i32_0 = arith.constant 0 : i32
    %c0_i32_1 = arith.constant 0 : i32
    %c0_i32_2 = arith.constant 0 : i32
    return %arg0, %c0_i32, %c0_i32_0, %c0_i32_1 : i32, i32, i32, i32
  }
  func.func @transform_4(%arg0: i32) -> (i32, i32) {
    %c0_i32 = arith.constant 0 : i32
    %c0_i32_0 = arith.constant 0 : i32
    %c0_i32_1 = arith.constant 0 : i32
    return %c0_i32, %c0_i32_0 : i32, i32
  }
  func.func @transform_5(%arg0: i32) -> (i32, i32, i32, i32) {
    %c0_i32 = arith.constant 0 : i32
    %c0_i32_0 = arith.constant 0 : i32
    %c0_i32_1 = arith.constant 0 : i32
    %c0_i32_2 = arith.constant 0 : i32
    return %arg0, %c0_i32, %c0_i32_0, %c0_i32_1 : i32, i32, i32, i32
  }
  func.func @transform_6(%arg0: i32) -> (i32, i32, i32) {
    %c0_i32 = arith.constant 0 : i32
    %c0_i32_0 = arith.constant 0 : i32
    %c0_i32_1 = arith.constant 0 : i32
    return %arg0, %c0_i32, %c0_i32_0 : i32, i32, i32
  }
}

module attributes {stable_mosaic.version = 11 : i64} {
  func.func @_conv2_kernel(%arg0: i32, %arg1: memref<16x16xf32, #tpu.memory_space<vmem>>, %arg2: memref<1x16xf32, #tpu.memory_space<vmem>>, %arg3: memref<2x8x8x16xf32, #tpu.memory_space<vmem>>, %arg4: memref<144x16xf32, #tpu.memory_space<vmem>>, %arg5: memref<2x8x8x16xf32, #tpu.memory_space<vmem>>, %arg6: memref<1x3x16xf32, #tpu.memory_space<vmem>>) attributes {dimension_semantics = [#tpu.dimension_semantics<parallel>], iteration_bounds = array<i64: 1>, scalar_prefetch = 0 : i64, scratch_operands = 0 : i64, tpu.core_type = #tpu.core_type<tc>, window_params = [{pipeline_mode = #tpu.pipeline_mode<synchronous>, transform_indices = @transform_0, window_bounds = array<i64: 16, 16>}, {pipeline_mode = #tpu.pipeline_mode<synchronous>, transform_indices = @transform_1, window_bounds = array<i64: 1, 16>}, {transform_indices = @transform_2, window_bounds = array<i64: 2, 8, 8, 16>}, {pipeline_mode = #tpu.pipeline_mode<synchronous>, transform_indices = @transform_3, window_bounds = array<i64: 144, 16>}, {transform_indices = @transform_4, window_bounds = array<i64: 2, 8, 8, 16>}, {transform_indices = @transform_5, window_bounds = array<i64: 1, 3, 16>}]} {
    %c0 = arith.constant 0 : index
    %c0_0 = arith.constant 0 : index
    %c0_1 = arith.constant 0 : index
    %c0_2 = arith.constant 0 : index
    %0 = vector.load %arg3[%c0, %c0_0, %c0_1, %c0_2] : memref<2x8x8x16xf32, #tpu.memory_space<vmem>>, vector<2x8x8x16xf32>
    %1 = vector.shape_cast %0 : vector<2x8x8x16xf32> to vector<128x16xf32>
    %c0_3 = arith.constant 0 : index
    %c0_4 = arith.constant 0 : index
    %2 = vector.load %arg1[%c0_3, %c0_4] : memref<16x16xf32, #tpu.memory_space<vmem>>, vector<16x16xf32>
    %cst = arith.constant dense<0.000000e+00> : vector<128x16xf32>
    %3 = tpu.matmul %1, %2, %cst {dimension_numbers = #tpu.dot_dimension_numbers<[1], [0], [0], [1], [0, 0, 1, 1], [], []>} : vector<128x16xf32>, vector<16x16xf32>, vector<128x16xf32> -> vector<128x16xf32>
    %c0_5 = arith.constant 0 : index
    %c0_6 = arith.constant 0 : index
    %4 = vector.load %arg2[%c0_5, %c0_6] : memref<1x16xf32, #tpu.memory_space<vmem>>, vector<1x16xf32>
    %5 = vector.broadcast %4 : vector<1x16xf32> to vector<128x16xf32>
    %6 = arith.addf %3, %5 : vector<128x16xf32>
    %cst_7 = arith.constant 0.000000e+00 : f32
    %7 = vector.broadcast %cst_7 : f32 to vector<128x16xf32>
    %8 = arith.maximumf %6, %7 : vector<128x16xf32>
    %9 = vector.shape_cast %8 : vector<128x16xf32> to vector<2x8x8x16xf32>
    %10 = vector.extract_strided_slice %9 {offsets = [0, 0, 0, 0], sizes = [2, 8, 1, 16], strides = [1, 1, 1, 1]} : vector<2x8x8x16xf32> to vector<2x8x1x16xf32>
    %11 = vector.extract_strided_slice %9 {offsets = [0, 0, 7, 0], sizes = [2, 8, 1, 16], strides = [1, 1, 1, 1]} : vector<2x8x8x16xf32> to vector<2x8x1x16xf32>
    %12 = tpu.concatenate %10, %9, %11 in 2 : vector<2x8x1x16xf32>, vector<2x8x8x16xf32>, vector<2x8x1x16xf32> -> vector<2x8x10x16xf32>
    %13 = vector.extract_strided_slice %12 {offsets = [0, 0, 0, 0], sizes = [2, 1, 10, 16], strides = [1, 1, 1, 1]} : vector<2x8x10x16xf32> to vector<2x1x10x16xf32>
    %14 = vector.extract_strided_slice %12 {offsets = [0, 7, 0, 0], sizes = [2, 1, 10, 16], strides = [1, 1, 1, 1]} : vector<2x8x10x16xf32> to vector<2x1x10x16xf32>
    %15 = tpu.concatenate %13, %12, %14 in 1 : vector<2x1x10x16xf32>, vector<2x8x10x16xf32>, vector<2x1x10x16xf32> -> vector<2x10x10x16xf32>
    %16 = vector.extract_strided_slice %15 {offsets = [0, 0, 0, 0], sizes = [2, 8, 8, 16], strides = [1, 1, 1, 1]} : vector<2x10x10x16xf32> to vector<2x8x8x16xf32>
    %17 = vector.shape_cast %16 : vector<2x8x8x16xf32> to vector<128x16xf32>
    %18 = vector.extract_strided_slice %15 {offsets = [0, 0, 1, 0], sizes = [2, 8, 8, 16], strides = [1, 1, 1, 1]} : vector<2x10x10x16xf32> to vector<2x8x8x16xf32>
    %19 = vector.shape_cast %18 : vector<2x8x8x16xf32> to vector<128x16xf32>
    %20 = vector.extract_strided_slice %15 {offsets = [0, 0, 2, 0], sizes = [2, 8, 8, 16], strides = [1, 1, 1, 1]} : vector<2x10x10x16xf32> to vector<2x8x8x16xf32>
    %21 = vector.shape_cast %20 : vector<2x8x8x16xf32> to vector<128x16xf32>
    %22 = vector.extract_strided_slice %15 {offsets = [0, 1, 0, 0], sizes = [2, 8, 8, 16], strides = [1, 1, 1, 1]} : vector<2x10x10x16xf32> to vector<2x8x8x16xf32>
    %23 = vector.shape_cast %22 : vector<2x8x8x16xf32> to vector<128x16xf32>
    %24 = vector.extract_strided_slice %15 {offsets = [0, 1, 1, 0], sizes = [2, 8, 8, 16], strides = [1, 1, 1, 1]} : vector<2x10x10x16xf32> to vector<2x8x8x16xf32>
    %25 = vector.shape_cast %24 : vector<2x8x8x16xf32> to vector<128x16xf32>
    %26 = vector.extract_strided_slice %15 {offsets = [0, 1, 2, 0], sizes = [2, 8, 8, 16], strides = [1, 1, 1, 1]} : vector<2x10x10x16xf32> to vector<2x8x8x16xf32>
    %27 = vector.shape_cast %26 : vector<2x8x8x16xf32> to vector<128x16xf32>
    %28 = vector.extract_strided_slice %15 {offsets = [0, 2, 0, 0], sizes = [2, 8, 8, 16], strides = [1, 1, 1, 1]} : vector<2x10x10x16xf32> to vector<2x8x8x16xf32>
    %29 = vector.shape_cast %28 : vector<2x8x8x16xf32> to vector<128x16xf32>
    %30 = vector.extract_strided_slice %15 {offsets = [0, 2, 1, 0], sizes = [2, 8, 8, 16], strides = [1, 1, 1, 1]} : vector<2x10x10x16xf32> to vector<2x8x8x16xf32>
    %31 = vector.shape_cast %30 : vector<2x8x8x16xf32> to vector<128x16xf32>
    %32 = vector.extract_strided_slice %15 {offsets = [0, 2, 2, 0], sizes = [2, 8, 8, 16], strides = [1, 1, 1, 1]} : vector<2x10x10x16xf32> to vector<2x8x8x16xf32>
    %33 = vector.shape_cast %32 : vector<2x8x8x16xf32> to vector<128x16xf32>
    %34 = tpu.concatenate %17, %19, %21, %23, %25, %27, %29, %31, %33 in 1 : vector<128x16xf32>, vector<128x16xf32>, vector<128x16xf32>, vector<128x16xf32>, vector<128x16xf32>, vector<128x16xf32>, vector<128x16xf32>, vector<128x16xf32>, vector<128x16xf32> -> vector<128x144xf32>
    %c0_8 = arith.constant 0 : index
    %c0_9 = arith.constant 0 : index
    %35 = vector.load %arg4[%c0_8, %c0_9] : memref<144x16xf32, #tpu.memory_space<vmem>>, vector<144x16xf32>
    %cst_10 = arith.constant dense<0.000000e+00> : vector<128x16xf32>
    %36 = tpu.matmul %34, %35, %cst_10 {dimension_numbers = #tpu.dot_dimension_numbers<[1], [0], [0], [1], [0, 0, 1, 1], [], []>} : vector<128x144xf32>, vector<144x16xf32>, vector<128x16xf32> -> vector<128x16xf32>
    %37 = vector.shape_cast %36 : vector<128x16xf32> to vector<2x8x8x16xf32>
    %c0_11 = arith.constant 0 : index
    %c0_12 = arith.constant 0 : index
    %c0_13 = arith.constant 0 : index
    %c0_14 = arith.constant 0 : index
    %38 = vector.load %arg5[%c0_11, %c0_12, %c0_13, %c0_14] : memref<2x8x8x16xf32, #tpu.memory_space<vmem>>, vector<2x8x8x16xf32>
    tpu.vector_store %arg5[%c0_11, %c0_12, %c0_13, %c0_14], %37 {strides = array<i32>} : memref<2x8x8x16xf32, #tpu.memory_space<vmem>>, vector<2x8x8x16xf32>,
    %39 = vector.extract_strided_slice %36 {offsets = [0, 0], sizes = [128, 8], strides = [1, 1]} : vector<128x16xf32> to vector<128x8xf32>
    %40 = vector.extract_strided_slice %36 {offsets = [0, 8], sizes = [128, 8], strides = [1, 1]} : vector<128x16xf32> to vector<128x8xf32>
    %cst_15 = arith.constant dense<0.000000e+00> : vector<16xf32>
    %41 = vector.multi_reduction <add>, %36, %cst_15 [0] : vector<128x16xf32> to vector<16xf32>
    %42 = vector.shape_cast %41 : vector<16xf32> to vector<1x16xf32>
    %43 = arith.mulf %36, %36 : vector<128x16xf32>
    %cst_16 = arith.constant dense<0.000000e+00> : vector<16xf32>
    %44 = vector.multi_reduction <add>, %43, %cst_16 [0] : vector<128x16xf32> to vector<16xf32>
    %45 = vector.shape_cast %44 : vector<16xf32> to vector<1x16xf32>
    %46 = arith.mulf %39, %40 : vector<128x8xf32>
    %cst_17 = arith.constant dense<0.000000e+00> : vector<8xf32>
    %47 = vector.multi_reduction <add>, %46, %cst_17 [0] : vector<128x8xf32> to vector<8xf32>
    %48 = vector.shape_cast %47 : vector<8xf32> to vector<1x8xf32>
    %49 = tpu.concatenate %48, %48 in 1 : vector<1x8xf32>, vector<1x8xf32> -> vector<1x16xf32>
    %50 = tpu.concatenate %42, %45, %49 in 0 : vector<1x16xf32>, vector<1x16xf32>, vector<1x16xf32> -> vector<3x16xf32>
    %c0_18 = arith.constant 0 : index
    %c0_19 = arith.constant 0 : index
    %c0_20 = arith.constant 0 : index
    %51 = vector.load %arg6[%c0_18, %c0_19, %c0_20] : memref<1x3x16xf32, #tpu.memory_space<vmem>>, vector<1x3x16xf32>
    %52 = vector.shape_cast %51 : vector<1x3x16xf32> to vector<3x16xf32>
    %53 = vector.shape_cast %50 : vector<3x16xf32> to vector<1x3x16xf32>
    tpu.vector_store %arg6[%c0_18, %c0_19, %c0_20], %53 {strides = array<i32>} : memref<1x3x16xf32, #tpu.memory_space<vmem>>, vector<1x3x16xf32>,
    return
  }
  func.func @transform_0(%arg0: i32) -> (i32, i32) {
    %c0_i32 = arith.constant 0 : i32
    %c0_i32_0 = arith.constant 0 : i32
    %c0_i32_1 = arith.constant 0 : i32
    return %c0_i32, %c0_i32_0 : i32, i32
  }
  func.func @transform_1(%arg0: i32) -> (i32, i32) {
    %c0_i32 = arith.constant 0 : i32
    %c0_i32_0 = arith.constant 0 : i32
    %c0_i32_1 = arith.constant 0 : i32
    return %c0_i32, %c0_i32_0 : i32, i32
  }
  func.func @transform_2(%arg0: i32) -> (i32, i32, i32, i32) {
    %c0_i32 = arith.constant 0 : i32
    %c0_i32_0 = arith.constant 0 : i32
    %c0_i32_1 = arith.constant 0 : i32
    %c0_i32_2 = arith.constant 0 : i32
    return %arg0, %c0_i32, %c0_i32_0, %c0_i32_1 : i32, i32, i32, i32
  }
  func.func @transform_3(%arg0: i32) -> (i32, i32) {
    %c0_i32 = arith.constant 0 : i32
    %c0_i32_0 = arith.constant 0 : i32
    %c0_i32_1 = arith.constant 0 : i32
    return %c0_i32, %c0_i32_0 : i32, i32
  }
  func.func @transform_4(%arg0: i32) -> (i32, i32, i32, i32) {
    %c0_i32 = arith.constant 0 : i32
    %c0_i32_0 = arith.constant 0 : i32
    %c0_i32_1 = arith.constant 0 : i32
    %c0_i32_2 = arith.constant 0 : i32
    return %arg0, %c0_i32, %c0_i32_0, %c0_i32_1 : i32, i32, i32, i32
  }
  func.func @transform_5(%arg0: i32) -> (i32, i32, i32) {
    %c0_i32 = arith.constant 0 : i32
    %c0_i32_0 = arith.constant 0 : i32
    %c0_i32_1 = arith.constant 0 : i32
    return %arg0, %c0_i32, %c0_i32_0 : i32, i32, i32
  }
}

module attributes {stable_mosaic.version = 11 : i64} {
  func.func @_bn_act_kernel(%arg0: i32, %arg1: memref<16x16xf32, #tpu.memory_space<vmem>>, %arg2: memref<1x16xf32, #tpu.memory_space<vmem>>, %arg3: memref<2x8x8x16xf32, #tpu.memory_space<vmem>>, %arg4: memref<2x8x8x16xf32, #tpu.memory_space<vmem>>) attributes {dimension_semantics = [#tpu.dimension_semantics<parallel>], iteration_bounds = array<i64: 1>, scalar_prefetch = 0 : i64, scratch_operands = 0 : i64, tpu.core_type = #tpu.core_type<tc>, window_params = [{pipeline_mode = #tpu.pipeline_mode<synchronous>, transform_indices = @transform_0, window_bounds = array<i64: 16, 16>}, {pipeline_mode = #tpu.pipeline_mode<synchronous>, transform_indices = @transform_1, window_bounds = array<i64: 1, 16>}, {transform_indices = @transform_2, window_bounds = array<i64: 2, 8, 8, 16>}, {transform_indices = @transform_3, window_bounds = array<i64: 2, 8, 8, 16>}]} {
    %c0 = arith.constant 0 : index
    %c0_0 = arith.constant 0 : index
    %c0_1 = arith.constant 0 : index
    %c0_2 = arith.constant 0 : index
    %0 = vector.load %arg3[%c0, %c0_0, %c0_1, %c0_2] : memref<2x8x8x16xf32, #tpu.memory_space<vmem>>, vector<2x8x8x16xf32>
    %1 = vector.shape_cast %0 : vector<2x8x8x16xf32> to vector<128x16xf32>
    %c0_3 = arith.constant 0 : index
    %c0_4 = arith.constant 0 : index
    %2 = vector.load %arg1[%c0_3, %c0_4] : memref<16x16xf32, #tpu.memory_space<vmem>>, vector<16x16xf32>
    %cst = arith.constant dense<0.000000e+00> : vector<128x16xf32>
    %3 = tpu.matmul %1, %2, %cst {dimension_numbers = #tpu.dot_dimension_numbers<[1], [0], [0], [1], [0, 0, 1, 1], [], []>} : vector<128x16xf32>, vector<16x16xf32>, vector<128x16xf32> -> vector<128x16xf32>
    %c0_5 = arith.constant 0 : index
    %c0_6 = arith.constant 0 : index
    %4 = vector.load %arg2[%c0_5, %c0_6] : memref<1x16xf32, #tpu.memory_space<vmem>>, vector<1x16xf32>
    %5 = vector.broadcast %4 : vector<1x16xf32> to vector<128x16xf32>
    %6 = arith.addf %3, %5 : vector<128x16xf32>
    %cst_7 = arith.constant 0.000000e+00 : f32
    %7 = vector.broadcast %cst_7 : f32 to vector<128x16xf32>
    %8 = arith.maximumf %6, %7 : vector<128x16xf32>
    %9 = vector.shape_cast %8 : vector<128x16xf32> to vector<2x8x8x16xf32>
    %c0_8 = arith.constant 0 : index
    %c0_9 = arith.constant 0 : index
    %c0_10 = arith.constant 0 : index
    %c0_11 = arith.constant 0 : index
    %10 = vector.load %arg4[%c0_8, %c0_9, %c0_10, %c0_11] : memref<2x8x8x16xf32, #tpu.memory_space<vmem>>, vector<2x8x8x16xf32>
    tpu.vector_store %arg4[%c0_8, %c0_9, %c0_10, %c0_11], %9 {strides = array<i32>} : memref<2x8x8x16xf32, #tpu.memory_space<vmem>>, vector<2x8x8x16xf32>,
    return
  }
  func.func @transform_0(%arg0: i32) -> (i32, i32) {
    %c0_i32 = arith.constant 0 : i32
    %c0_i32_0 = arith.constant 0 : i32
    %c0_i32_1 = arith.constant 0 : i32
    return %c0_i32, %c0_i32_0 : i32, i32
  }
  func.func @transform_1(%arg0: i32) -> (i32, i32) {
    %c0_i32 = arith.constant 0 : i32
    %c0_i32_0 = arith.constant 0 : i32
    %c0_i32_1 = arith.constant 0 : i32
    return %c0_i32, %c0_i32_0 : i32, i32
  }
  func.func @transform_2(%arg0: i32) -> (i32, i32, i32, i32) {
    %c0_i32 = arith.constant 0 : i32
    %c0_i32_0 = arith.constant 0 : i32
    %c0_i32_1 = arith.constant 0 : i32
    %c0_i32_2 = arith.constant 0 : i32
    return %arg0, %c0_i32, %c0_i32_0, %c0_i32_1 : i32, i32, i32, i32
  }
  func.func @transform_3(%arg0: i32) -> (i32, i32, i32, i32) {
    %c0_i32 = arith.constant 0 : i32
    %c0_i32_0 = arith.constant 0 : i32
    %c0_i32_1 = arith.constant 0 : i32
    %c0_i32_2 = arith.constant 0 : i32
    return %arg0, %c0_i32, %c0_i32_0, %c0_i32_1 : i32, i32, i32, i32
  }
}

</mosaic_0001>

<llo_original>
// kernel: custom-call
$region0: #{custom-call}
  %s0 = inlined_call_operand.vmem [shape: c64[2,4,16,16], index: 0, kind: input, shape index: {}]
  %s1 = inlined_call_operand.vmem [shape: f32[2,4,16,16], index: 1, kind: output, shape index: {}]
  %v2 = vld [vmem:[%s0] sm:$0xff]
  %3 = vst [vmem:[%s1] sm:$0xff] %v2
  %s4 = scalar_lea.vmem %s1, 8
  %s5 = scalar_lea.vmem %s0, 8
  %v6 = vld [vmem:[%s5] sm:$0xff]
  %7 = vst [vmem:[%s4] sm:$0xff] %v6
  %s8 = scalar_lea.vmem %s1, 16
  %s9 = scalar_lea.vmem %s0, 16
  %v10 = vld [vmem:[%s9] sm:$0xff]
  %11 = vst [vmem:[%s8] sm:$0xff] %v10
  %s12 = scalar_lea.vmem %s1, 24
  %s13 = scalar_lea.vmem %s0, 24
  %v14 = vld [vmem:[%s13] sm:$0xff]
  %15 = vst [vmem:[%s12] sm:$0xff] %v14
  %s16 = scalar_lea.vmem %s1, 32
  %s17 = scalar_lea.vmem %s0, 32
  %v18 = vld [vmem:[%s17] sm:$0xff]
  %19 = vst [vmem:[%s16] sm:$0xff] %v18
  %s20 = scalar_lea.vmem %s1, 40
  %s21 = scalar_lea.vmem %s0, 40
  %v22 = vld [vmem:[%s21] sm:$0xff]
  %23 = vst [vmem:[%s20] sm:$0xff] %v22
  %s24 = scalar_lea.vmem %s1, 48
  %s25 = scalar_lea.vmem %s0, 48
  %v26 = vld [vmem:[%s25] sm:$0xff]
  %27 = vst [vmem:[%s24] sm:$0xff] %v26
  %s28 = scalar_lea.vmem %s1, 56
  %s29 = scalar_lea.vmem %s0, 56
  %v30 = vld [vmem:[%s29] sm:$0xff]
  %31 = vst [vmem:[%s28] sm:$0xff] %v30
  %s32 = scalar_lea.vmem %s1, 64
  %s33 = scalar_lea.vmem %s0, 64
  %v34 = vld [vmem:[%s33] sm:$0xff]
  %35 = vst [vmem:[%s32] sm:$0xff] %v34
  %s36 = scalar_lea.vmem %s1, 72
  %s37 = scalar_lea.vmem %s0, 72
  %v38 = vld [vmem:[%s37] sm:$0xff]
  %39 = vst [vmem:[%s36] sm:$0xff] %v38
  %s40 = scalar_lea.vmem %s1, 80
  %s41 = scalar_lea.vmem %s0, 80
  %v42 = vld [vmem:[%s41] sm:$0xff]
  %43 = vst [vmem:[%s40] sm:$0xff] %v42
  %s44 = scalar_lea.vmem %s1, 88
  %s45 = scalar_lea.vmem %s0, 88
  %v46 = vld [vmem:[%s45] sm:$0xff]
  %47 = vst [vmem:[%s44] sm:$0xff] %v46
  %s48 = scalar_lea.vmem %s1, 96
  %s49 = scalar_lea.vmem %s0, 96
  %v50 = vld [vmem:[%s49] sm:$0xff]
  %51 = vst [vmem:[%s48] sm:$0xff] %v50
  %s52 = scalar_lea.vmem %s1, 104
  %s53 = scalar_lea.vmem %s0, 104
  %v54 = vld [vmem:[%s53] sm:$0xff]
  %55 = vst [vmem:[%s52] sm:$0xff] %v54
  %s56 = scalar_lea.vmem %s1, 112
  %s57 = scalar_lea.vmem %s0, 112
  %v58 = vld [vmem:[%s57] sm:$0xff]
  %59 = vst [vmem:[%s56] sm:$0xff] %v58
  %s60 = scalar_lea.vmem %s1, 120
  %s61 = scalar_lea.vmem %s0, 120
  %v62 = vld [vmem:[%s61] sm:$0xff]
  %63 = vst [vmem:[%s60] sm:$0xff] %v62

// kernel: custom-call.1
$region0: #{custom-call.1}
  %s0 = inlined_call_operand.vmem [shape: c64[2,4,16,16], index: 0, kind: input, shape index: {}]
  %s1 = inlined_call_operand.vmem [shape: f32[2,4,16,16], index: 1, kind: output, shape index: {}]
  %s2 = scalar_lea.vmem %s0, 128
  %v3 = vld [vmem:[%s2] sm:$0xff]
  %4 = vst [vmem:[%s1] sm:$0xff] %v3
  %s5 = scalar_lea.vmem %s1, 8
  %s6 = scalar_lea.vmem %s2, 8
  %v7 = vld [vmem:[%s6] sm:$0xff]
  %8 = vst [vmem:[%s5] sm:$0xff] %v7
  %s9 = scalar_lea.vmem %s1, 16
  %s10 = scalar_lea.vmem %s2, 16
  %v11 = vld [vmem:[%s10] sm:$0xff]
  %12 = vst [vmem:[%s9] sm:$0xff] %v11
  %s13 = scalar_lea.vmem %s1, 24
  %s14 = scalar_lea.vmem %s2, 24
  %v15 = vld [vmem:[%s14] sm:$0xff]
  %16 = vst [vmem:[%s13] sm:$0xff] %v15
  %s17 = scalar_lea.vmem %s1, 32
  %s18 = scalar_lea.vmem %s2, 32
  %v19 = vld [vmem:[%s18] sm:$0xff]
  %20 = vst [vmem:[%s17] sm:$0xff] %v19
  %s21 = scalar_lea.vmem %s1, 40
  %s22 = scalar_lea.vmem %s2, 40
  %v23 = vld [vmem:[%s22] sm:$0xff]
  %24 = vst [vmem:[%s21] sm:$0xff] %v23
  %s25 = scalar_lea.vmem %s1, 48
  %s26 = scalar_lea.vmem %s2, 48
  %v27 = vld [vmem:[%s26] sm:$0xff]
  %28 = vst [vmem:[%s25] sm:$0xff] %v27
  %s29 = scalar_lea.vmem %s1, 56
  %s30 = scalar_lea.vmem %s2, 56
  %v31 = vld [vmem:[%s30] sm:$0xff]
  %32 = vst [vmem:[%s29] sm:$0xff] %v31
  %s33 = scalar_lea.vmem %s1, 64
  %s34 = scalar_lea.vmem %s2, 64
  %v35 = vld [vmem:[%s34] sm:$0xff]
  %36 = vst [vmem:[%s33] sm:$0xff] %v35
  %s37 = scalar_lea.vmem %s1, 72
  %s38 = scalar_lea.vmem %s2, 72
  %v39 = vld [vmem:[%s38] sm:$0xff]
  %40 = vst [vmem:[%s37] sm:$0xff] %v39
  %s41 = scalar_lea.vmem %s1, 80
  %s42 = scalar_lea.vmem %s2, 80
  %v43 = vld [vmem:[%s42] sm:$0xff]
  %44 = vst [vmem:[%s41] sm:$0xff] %v43
  %s45 = scalar_lea.vmem %s1, 88
  %s46 = scalar_lea.vmem %s2, 88
  %v47 = vld [vmem:[%s46] sm:$0xff]
  %48 = vst [vmem:[%s45] sm:$0xff] %v47
  %s49 = scalar_lea.vmem %s1, 96
  %s50 = scalar_lea.vmem %s2, 96
  %v51 = vld [vmem:[%s50] sm:$0xff]
  %52 = vst [vmem:[%s49] sm:$0xff] %v51
  %s53 = scalar_lea.vmem %s1, 104
  %s54 = scalar_lea.vmem %s2, 104
  %v55 = vld [vmem:[%s54] sm:$0xff]
  %56 = vst [vmem:[%s53] sm:$0xff] %v55
  %s57 = scalar_lea.vmem %s1, 112
  %s58 = scalar_lea.vmem %s2, 112
  %v59 = vld [vmem:[%s58] sm:$0xff]
  %60 = vst [vmem:[%s57] sm:$0xff] %v59
  %s61 = scalar_lea.vmem %s1, 120
  %s62 = scalar_lea.vmem %s2, 120
  %v63 = vld [vmem:[%s62] sm:$0xff]
  %64 = vst [vmem:[%s61] sm:$0xff] %v63

// kernel: neg.4
$region0: #{neg.4}
  #allocation0 [shape = 's32[1]{0}', space=sflag, size = 0x4, scoped, tag = 'scoped memory for neg.4']
  %s0 = inlined_call_operand.vmem [shape: f32[9,4,8], index: 0, kind: input, shape index: {}]
  %s1 = inlined_call_operand.vmem [shape: f32[9,4,8], index: 1, kind: output, shape index: {}]
  %v2 = vld [vmem:[%s0] sm:$0xf]
  %3 = xla_tuple %v2
  %4 = xla_tuple %3
  %v5 = vxor.u32 %v2, 2147483648
  %6 = xla_tuple %v5
  %7 = vst [vmem:[%s1] sm:$0xf] %v5
  %s8 = scalar_lea.vmem %s0, 4
  %v9 = vld [vmem:[%s8] sm:$0xf]
  %10 = xla_tuple %v9
  %11 = xla_tuple %10
  %v12 = vxor.u32 %v9, 2147483648
  %13 = xla_tuple %v12
  %s14 = scalar_lea.vmem %s1, 4
  %15 = vst [vmem:[%s14] sm:$0xf] %v12
  %s16 = scalar_lea.vmem %s0, 8
  %v17 = vld [vmem:[%s16] sm:$0xf]
  %18 = xla_tuple %v17
  %19 = xla_tuple %18
  %v20 = vxor.u32 %v17, 2147483648
  %21 = xla_tuple %v20
  %s22 = scalar_lea.vmem %s1, 8
  %23 = vst [vmem:[%s22] sm:$0xf] %v20
  %s24 = scalar_lea.vmem %s0, 12
  %v25 = vld [vmem:[%s24] sm:$0xf]
  %26 = xla_tuple %v25
  %27 = xla_tuple %26
  %v28 = vxor.u32 %v25, 2147483648
  %29 = xla_tuple %v28
  %s30 = scalar_lea.vmem %s1, 12
  %31 = vst [vmem:[%s30] sm:$0xf] %v28
  %s32 = scalar_lea.vmem %s0, 16
  %v33 = vld [vmem:[%s32] sm:$0xf]
  %34 = xla_tuple %v33
  %35 = xla_tuple %34
  %v36 = vxor.u32 %v33, 2147483648
  %37 = xla_tuple %v36
  %s38 = scalar_lea.vmem %s1, 16
  %39 = vst [vmem:[%s38] sm:$0xf] %v36
  %s40 = scalar_lea.vmem %s0, 20
  %v41 = vld [vmem:[%s40] sm:$0xf]
  %42 = xla_tuple %v41
  %43 = xla_tuple %42
  %v44 = vxor.u32 %v41, 2147483648
  %45 = xla_tuple %v44
  %s46 = scalar_lea.vmem %s1, 20
  %47 = vst [vmem:[%s46] sm:$0xf] %v44
  %s48 = scalar_lea.vmem %s0, 24
  %v49 = vld [vmem:[%s48] sm:$0xf]
  %50 = xla_tuple %v49
  %51 = xla_tuple %50
  %v52 = vxor.u32 %v49, 2147483648
  %53 = xla_tuple %v52
  %s54 = scalar_lea.vmem %s1, 24
  %55 = vst [vmem:[%s54] sm:$0xf] %v52
  %s56 = scalar_lea.vmem %s0, 28
  %v57 = vld [vmem:[%s56] sm:$0xf]
  %58 = xla_tuple %v57
  %59 = xla_tuple %58
  %v60 = vxor.u32 %v57, 2147483648
  %61 = xla_tuple %v60
  %s62 = scalar_lea.vmem %s1, 28
  %63 = vst [vmem:[%s62] sm:$0xf] %v60
  %s64 = scalar_lea.vmem %s0, 32
  %v65 = vld [vmem:[%s64] sm:$0xf]
  %66 = xla_tuple %v65
  %67 = xla_tuple %66
  %v68 = vxor.u32 %v65, 2147483648
  %69 = xla_tuple %v68
  %s70 = scalar_lea.vmem %s1, 32
  %71 = vst [vmem:[%s70] sm:$0xf] %v68

// kernel: neg.6
$region0: #{neg.6}
  #allocation0 [shape = 's32[1]{0}', space=sflag, size = 0x4, scoped, tag = 'scoped memory for neg.6']
  %s0 = inlined_call_operand.vmem [shape: f32[9,8,8], index: 0, kind: input, shape index: {}]
  %s1 = inlined_call_operand.vmem [shape: f32[9,8,8], index: 1, kind: output, shape index: {}]
  %v2 = vld [vmem:[%s0] sm:$0xff]
  %3 = xla_tuple %v2
  %4 = xla_tuple %3
  %v5 = vxor.u32 %v2, 2147483648
  %6 = xla_tuple %v5
  %7 = vst [vmem:[%s1] sm:$0xff] %v5
  %s8 = scalar_lea.vmem %s0, 8
  %v9 = vld [vmem:[%s8] sm:$0xff]
  %10 = xla_tuple %v9
  %11 = xla_tuple %10
  %v12 = vxor.u32 %v9, 2147483648
  %13 = xla_tuple %v12
  %s14 = scalar_lea.vmem %s1, 8
  %15 = vst [vmem:[%s14] sm:$0xff] %v12
  %s16 = scalar_lea.vmem %s0, 16
  %v17 = vld [vmem:[%s16] sm:$0xff]
  %18 = xla_tuple %v17
  %19 = xla_tuple %18
  %v20 = vxor.u32 %v17, 2147483648
  %21 = xla_tuple %v20
  %s22 = scalar_lea.vmem %s1, 16
  %23 = vst [vmem:[%s22] sm:$0xff] %v20
  %s24 = scalar_lea.vmem %s0, 24
  %v25 = vld [vmem:[%s24] sm:$0xff]
  %26 = xla_tuple %v25
  %27 = xla_tuple %26
  %v28 = vxor.u32 %v25, 2147483648
  %29 = xla_tuple %v28
  %s30 = scalar_lea.vmem %s1, 24
  %31 = vst [vmem:[%s30] sm:$0xff] %v28
  %s32 = scalar_lea.vmem %s0, 32
  %v33 = vld [vmem:[%s32] sm:$0xff]
  %34 = xla_tuple %v33
  %35 = xla_tuple %34
  %v36 = vxor.u32 %v33, 2147483648
  %37 = xla_tuple %v36
  %s38 = scalar_lea.vmem %s1, 32
  %39 = vst [vmem:[%s38] sm:$0xff] %v36
  %s40 = scalar_lea.vmem %s0, 40
  %v41 = vld [vmem:[%s40] sm:$0xff]
  %42 = xla_tuple %v41
  %43 = xla_tuple %42
  %v44 = vxor.u32 %v41, 2147483648
  %45 = xla_tuple %v44
  %s46 = scalar_lea.vmem %s1, 40
  %47 = vst [vmem:[%s46] sm:$0xff] %v44
  %s48 = scalar_lea.vmem %s0, 48
  %v49 = vld [vmem:[%s48] sm:$0xff]
  %50 = xla_tuple %v49
  %51 = xla_tuple %50
  %v52 = vxor.u32 %v49, 2147483648
  %53 = xla_tuple %v52
  %s54 = scalar_lea.vmem %s1, 48
  %55 = vst [vmem:[%s54] sm:$0xff] %v52
  %s56 = scalar_lea.vmem %s0, 56
  %v57 = vld [vmem:[%s56] sm:$0xff]
  %58 = xla_tuple %v57
  %59 = xla_tuple %58
  %v60 = vxor.u32 %v57, 2147483648
  %61 = xla_tuple %v60
  %s62 = scalar_lea.vmem %s1, 56
  %63 = vst [vmem:[%s62] sm:$0xff] %v60

// kernel: custom-call.2
$region0: #{custom-call.2}
  %s0 = inlined_call_operand.vmem [shape: f32[2,8,8,8], index: 0, kind: input, shape index: {}]
  %s1 = inlined_call_operand.vmem [shape: f32[2,8,8,8], index: 1, kind: input, shape index: {}]
  %s2 = inlined_call_operand.vmem [shape: c64[2,8,8,8], index: 2, kind: output, shape index: {}]
  %s3 = scalar_lea.vmem %s2, 128
  %v4 = vld [vmem:[%s0] sm:$0xff]
  %5 = vst [vmem:[%s2] sm:$0xff] %v4
  %s6 = scalar_lea.vmem %s2, 8
  %s7 = scalar_lea.vmem %s0, 8
  %v8 = vld [vmem:[%s7] sm:$0xff]
  %9 = vst [vmem:[%s6] sm:$0xff] %v8
  %s10 = scalar_lea.vmem %s2, 16
  %s11 = scalar_lea.vmem %s0, 16
  %v12 = vld [vmem:[%s11] sm:$0xff]
  %13 = vst [vmem:[%s10] sm:$0xff] %v12
  %s14 = scalar_lea.vmem %s2, 24
  %s15 = scalar_lea.vmem %s0, 24
  %v16 = vld [vmem:[%s15] sm:$0xff]
  %17 = vst [vmem:[%s14] sm:$0xff] %v16
  %s18 = scalar_lea.vmem %s2, 32
  %s19 = scalar_lea.vmem %s0, 32
  %v20 = vld [vmem:[%s19] sm:$0xff]
  %21 = vst [vmem:[%s18] sm:$0xff] %v20
  %s22 = scalar_lea.vmem %s2, 40
  %s23 = scalar_lea.vmem %s0, 40
  %v24 = vld [vmem:[%s23] sm:$0xff]
  %25 = vst [vmem:[%s22] sm:$0xff] %v24
  %s26 = scalar_lea.vmem %s2, 48
  %s27 = scalar_lea.vmem %s0, 48
  %v28 = vld [vmem:[%s27] sm:$0xff]
  %29 = vst [vmem:[%s26] sm:$0xff] %v28
  %s30 = scalar_lea.vmem %s2, 56
  %s31 = scalar_lea.vmem %s0, 56
  %v32 = vld [vmem:[%s31] sm:$0xff]
  %33 = vst [vmem:[%s30] sm:$0xff] %v32
  %s34 = scalar_lea.vmem %s2, 64
  %s35 = scalar_lea.vmem %s0, 64
  %v36 = vld [vmem:[%s35] sm:$0xff]
  %37 = vst [vmem:[%s34] sm:$0xff] %v36
  %s38 = scalar_lea.vmem %s2, 72
  %s39 = scalar_lea.vmem %s0, 72
  %v40 = vld [vmem:[%s39] sm:$0xff]
  %41 = vst [vmem:[%s38] sm:$0xff] %v40
  %s42 = scalar_lea.vmem %s2, 80
  %s43 = scalar_lea.vmem %s0, 80
  %v44 = vld [vmem:[%s43] sm:$0xff]
  %45 = vst [vmem:[%s42] sm:$0xff] %v44
  %s46 = scalar_lea.vmem %s2, 88
  %s47 = scalar_lea.vmem %s0, 88
  %v48 = vld [vmem:[%s47] sm:$0xff]
  %49 = vst [vmem:[%s46] sm:$0xff] %v48
  %s50 = scalar_lea.vmem %s2, 96
  %s51 = scalar_lea.vmem %s0, 96
  %v52 = vld [vmem:[%s51] sm:$0xff]
  %53 = vst [vmem:[%s50] sm:$0xff] %v52
  %s54 = scalar_lea.vmem %s2, 104
  %s55 = scalar_lea.vmem %s0, 104
  %v56 = vld [vmem:[%s55] sm:$0xff]
  %57 = vst [vmem:[%s54] sm:$0xff] %v56
  %s58 = scalar_lea.vmem %s2, 112
  %s59 = scalar_lea.vmem %s0, 112
  %v60 = vld [vmem:[%s59] sm:$0xff]
  %61 = vst [vmem:[%s58] sm:$0xff] %v60
  %s62 = scalar_lea.vmem %s2, 120
  %s63 = scalar_lea.vmem %s0, 120
  %v64 = vld [vmem:[%s63] sm:$0xff]
  %65 = vst [vmem:[%s62] sm:$0xff] %v64
  %v66 = vld [vmem:[%s1] sm:$0xff]
  %67 = vst [vmem:[%s3] sm:$0xff] %v66
  %s68 = scalar_lea.vmem %s3, 8
  %s69 = scalar_lea.vmem %s1, 8
  %v70 = vld [vmem:[%s69] sm:$0xff]
  %71 = vst [vmem:[%s68] sm:$0xff] %v70
  %s72 = scalar_lea.vmem %s3, 16
  %s73 = scalar_lea.vmem %s1, 16
  %v74 = vld [vmem:[%s73] sm:$0xff]
  %75 = vst [vmem:[%s72] sm:$0xff] %v74
  %s76 = scalar_lea.vmem %s3, 24
  %s77 = scalar_lea.vmem %s1, 24
  %v78 = vld [vmem:[%s77] sm:$0xff]
  %79 = vst [vmem:[%s76] sm:$0xff] %v78
  %s80 = scalar_lea.vmem %s3, 32
  %s81 = scalar_lea.vmem %s1, 32
  %v82 = vld [vmem:[%s81] sm:$0xff]
  %83 = vst [vmem:[%s80] sm:$0xff] %v82
  %s84 = scalar_lea.vmem %s3, 40
  %s85 = scalar_lea.vmem %s1, 40
  %v86 = vld [vmem:[%s85] sm:$0xff]
  %87 = vst [vmem:[%s84] sm:$0xff] %v86
  %s88 = scalar_lea.vmem %s3, 48
  %s89 = scalar_lea.vmem %s1, 48
  %v90 = vld [vmem:[%s89] sm:$0xff]
  %91 = vst [vmem:[%s88] sm:$0xff] %v90
  %s92 = scalar_lea.vmem %s3, 56
  %s93 = scalar_lea.vmem %s1, 56
  %v94 = vld [vmem:[%s93] sm:$0xff]
  %95 = vst [vmem:[%s92] sm:$0xff] %v94
  %s96 = scalar_lea.vmem %s3, 64
  %s97 = scalar_lea.vmem %s1, 64
  %v98 = vld [vmem:[%s97] sm:$0xff]
  %99 = vst [vmem:[%s96] sm:$0xff] %v98
  %s100 = scalar_lea.vmem %s3, 72
  %s101 = scalar_lea.vmem %s1, 72
  %v102 = vld [vmem:[%s101] sm:$0xff]
  %103 = vst [vmem:[%s100] sm:$0xff] %v102
  %s104 = scalar_lea.vmem %s3, 80
  %s105 = scalar_lea.vmem %s1, 80
  %v106 = vld [vmem:[%s105] sm:$0xff]
  %107 = vst [vmem:[%s104] sm:$0xff] %v106
  %s108 = scalar_lea.vmem %s3, 88
  %s109 = scalar_lea.vmem %s1, 88
  %v110 = vld [vmem:[%s109] sm:$0xff]
  %111 = vst [vmem:[%s108] sm:$0xff] %v110
  %s112 = scalar_lea.vmem %s3, 96
  %s113 = scalar_lea.vmem %s1, 96
  %v114 = vld [vmem:[%s113] sm:$0xff]
  %115 = vst [vmem:[%s112] sm:$0xff] %v114
  %s116 = scalar_lea.vmem %s3, 104
  %s117 = scalar_lea.vmem %s1, 104
  %v118 = vld [vmem:[%s117] sm:$0xff]
  %119 = vst [vmem:[%s116] sm:$0xff] %v118
  %s120 = scalar_lea.vmem %s3, 112
  %s121 = scalar_lea.vmem %s1, 112
  %v122 = vld [vmem:[%s121] sm:$0xff]
  %123 = vst [vmem:[%s120] sm:$0xff] %v122
  %s124 = scalar_lea.vmem %s3, 120
  %s125 = scalar_lea.vmem %s1, 120
  %v126 = vld [vmem:[%s125] sm:$0xff]
  %127 = vst [vmem:[%s124] sm:$0xff] %v126

// kernel: down_forward.5
$region0: #{down_forward.5}
  #allocation0 [shape = 'u32[]', space=smem, size = 0x4, offset = 0x4, fixed_abs, tag = 'smem constant byte address 0x4 - core index']
  #allocation1 [shape = 'u32[72,128]{1,0:T(1,128)}', space=vmem, size = 0x9000, scoped, tag = 'internal scratch']
  %s0 = inlined_call_operand.vmem [shape: f32[16,16], index: 0, kind: input, shape index: {}]
  %s1 = inlined_call_operand.vmem [shape: f32[1,16], index: 1, kind: input, shape index: {}]
  %s2 = inlined_call_operand.vmem [shape: f32[2,8,8,16], index: 2, kind: input, shape index: {}]
  %s3 = inlined_call_operand.vmem [shape: f32[2,8,8,16], index: 3, kind: output, shape index: {}]
  %s4 = sld [smem:[#allocation0]]
  $region22: #{down_forward.5} parent=0
    _
  %s6 = ssub.s32 1, %s4
  %s7 = scalar_select 0, %s6, %s4
  // Predicated region
  $region2: #{down_forward.5} parent=0 // pred_check
    _
  $region3: #{down_forward.5} parent=0 // pred_check_branch
    %9 = sbr.rel (0) target = $region5
  $region4: #{down_forward.5} parent=0 // pred_region
    _
  $region5: #{down_forward.5} parent=0 // pred_fallthru
    _
  // Predicated region
  $region6: #{down_forward.5} parent=0 // pred_check
    _
  $region7: #{down_forward.5} parent=0 // pred_check_branch
    %11 = sbr.rel (0) target = $region9
  $region8: #{down_forward.5} parent=0 // pred_region
    _
  $region9: #{down_forward.5} parent=0 // pred_fallthru
    _
  // Predicated region
  $region10: #{down_forward.5} parent=0 // pred_check
    _
  $region11: #{down_forward.5} parent=0 // pred_check_branch
    %13 = sbr.rel (0) target = $region13
  $region12: #{down_forward.5} parent=0 // pred_region
    _
  $region13: #{down_forward.5} parent=0 // pred_fallthru
    _
  %v14 = vld [vmem:[%s2] sm:$0xff]
  %v15 = vld [vmem:[%s2 + $0x8] sm:$0xff]
  %v16 = vld [vmem:[%s2 + $0x10] sm:$0xff]
  %v17 = vld [vmem:[%s2 + $0x18] sm:$0xff]
  %v18 = vld [vmem:[%s2 + $0x20] sm:$0xff]
  %v19 = vld [vmem:[%s2 + $0x28] sm:$0xff]
  %v20 = vld [vmem:[%s2 + $0x30] sm:$0xff]
  %v21 = vld [vmem:[%s2 + $0x38] sm:$0xff]
  %v22 = vld [vmem:[%s2 + $0x40] sm:$0xff]
  %v23 = vld [vmem:[%s2 + $0x48] sm:$0xff]
  %v24 = vld [vmem:[%s2 + $0x50] sm:$0xff]
  %v25 = vld [vmem:[%s2 + $0x58] sm:$0xff]
  %v26 = vld [vmem:[%s2 + $0x60] sm:$0xff]
  %v27 = vld [vmem:[%s2 + $0x68] sm:$0xff]
  %v28 = vld [vmem:[%s2 + $0x70] sm:$0xff]
  %v29 = vld [vmem:[%s2 + $0x78] sm:$0xff]
  %v30 = vld [vmem:[%s0] sm:$0xff]
  %v31 = vld [vmem:[%s0 + $0x8] sm:$0xff]
  %v32 = vld [vmem:[%s1] sm:$0x1]
  %v34 = vperm.slane %v32, 0
  %vm36 = vcmask 130048
  %v38 = vsel %vm36, %v14, 0
  %v41 = vsel %vm36, %v15, 0
  %v44 = vsel %vm36, %v16, 0
  %v47 = vsel %vm36, %v17, 0
  %v50 = vsel %vm36, %v18, 0
  %v53 = vsel %vm36, %v19, 0
  %v56 = vsel %vm36, %v20, 0
  %v59 = vsel %vm36, %v21, 0
  %v62 = vsel %vm36, %v22, 0
  %v65 = vsel %vm36, %v23, 0
  %v68 = vsel %vm36, %v24, 0
  %v71 = vsel %vm36, %v25, 0
  %v74 = vsel %vm36, %v26, 0
  %v77 = vsel %vm36, %v27, 0
  %v80 = vsel %vm36, %v28, 0
  %v83 = vsel %vm36, %v29, 0
  %85 = vmatpush.msra.mxu0 0.0
  %86 = vmatpush.msra.mxu0 0.0
  %87 = vmatpush.msra.mxu0 0.0
  %88 = vmatpush.msra.mxu0 0.0
  %89 = vmatpush.msra.mxu0 0.0
  %90 = vmatpush.msra.mxu0 0.0
  %91 = vmatpush.msra.mxu0 0.0
  %92 = vmatpush.msra.mxu0 0.0
  %93 = vmatpush.msra.mxu0 0.0
  %94 = vmatpush.msra.mxu0 0.0
  %95 = vmatpush.msra.mxu0 0.0
  %96 = vmatpush.msra.mxu0 0.0
  %97 = vmatpush.msra.mxu0 0.0
  %98 = vmatpush.msra.mxu0 0.0
  %99 = vmatpush.msra.mxu0 %v31
  %100 = vmatpush.msra.mxu0 %v30
  %101 = vmatmul.f32.gmra.mxu0 %v38
  %v102 = vpop.f32.mrf.mxu0
  %v103 = vadd.f32 %v34, %v102
  %104 = vmatmul.f32.gmra.mxu0 %v41
  %v105 = vpop.f32.mrf.mxu0
  %v106 = vadd.f32 %v34, %v105
  %107 = vmatmul.f32.gmra.mxu0 %v44
  %v108 = vpop.f32.mrf.mxu0
  %v109 = vadd.f32 %v34, %v108
  %110 = vmatmul.f32.gmra.mxu0 %v47
  %v111 = vpop.f32.mrf.mxu0
  %v112 = vadd.f32 %v34, %v111
  %113 = vmatmul.f32.gmra.mxu0 %v50
  %v114 = vpop.f32.mrf.mxu0
  %v115 = vadd.f32 %v34, %v114
  %116 = vmatmul.f32.gmra.mxu0 %v53
  %v117 = vpop.f32.mrf.mxu0
  %v118 = vadd.f32 %v34, %v117
  %119 = vmatmul.f32.gmra.mxu0 %v56
  %v120 = vpop.f32.mrf.mxu0
  %v121 = vadd.f32 %v34, %v120
  %122 = vmatmul.f32.gmra.mxu0 %v59
  %v123 = vpop.f32.mrf.mxu0
  %v124 = vadd.f32 %v34, %v123
  %125 = vmatmul.f32.gmra.mxu0 %v62
  %v126 = vpop.f32.mrf.mxu0
  %v127 = vadd.f32 %v34, %v126
  %128 = vmatmul.f32.gmra.mxu0 %v65
  %v129 = vpop.f32.mrf.mxu0
  %v130 = vadd.f32 %v34, %v129
  %131 = vmatmul.f32.gmra.mxu0 %v68
  %v132 = vpop.f32.mrf.mxu0
  %v133 = vadd.f32 %v34, %v132
  %134 = vmatmul.f32.gmra.mxu0 %v71
  %v135 = vpop.f32.mrf.mxu0
  %v136 = vadd.f32 %v34, %v135
  %137 = vmatmul.f32.gmra.mxu0 %v74
  %v138 = vpop.f32.mrf.mxu0
  %v139 = vadd.f32 %v34, %v138
  %140 = vmatmul.f32.gmra.mxu0 %v77
  %v141 = vpop.f32.mrf.mxu0
  %v142 = vadd.f32 %v34, %v141
  %143 = vmatmul.f32.gmra.mxu0 %v80
  %v144 = vpop.f32.mrf.mxu0
  %v145 = vadd.f32 %v34, %v144
  %146 = vmatmul.f32.gmra.mxu0 %v83
  %v147 = vpop.f32.mrf.mxu0
  %v148 = vadd.f32 %v34, %v147
  %149 = vdwg.mxu0
  %v150 = vmax.f32 %v103, 0.0
  %v151 = vmax.f32 %v106, 0.0
  %v152 = vmax.f32 %v109, 0.0
  %v153 = vmax.f32 %v112, 0.0
  %v154 = vmax.f32 %v115, 0.0
  %v155 = vmax.f32 %v118, 0.0
  %v156 = vmax.f32 %v121, 0.0
  %v157 = vmax.f32 %v124, 0.0
  %v158 = vmax.f32 %v127, 0.0
  %v159 = vmax.f32 %v130, 0.0
  %v160 = vmax.f32 %v133, 0.0
  %v161 = vmax.f32 %v136, 0.0
  %v162 = vmax.f32 %v139, 0.0
  %v163 = vmax.f32 %v142, 0.0
  %v164 = vmax.f32 %v145, 0.0
  %v165 = vmax.f32 %v148, 0.0
  %166 = vst.msk [vmem:[%s3] sm:$0xff] %vm36, %v150
  %167 = vst.msk [vmem:[%s3 + $0x8] sm:$0xff] %vm36, %v151
  %168 = vst.msk [vmem:[%s3 + $0x10] sm:$0xff] %vm36, %v152
  %169 = vst.msk [vmem:[%s3 + $0x18] sm:$0xff] %vm36, %v153
  %170 = vst.msk [vmem:[%s3 + $0x20] sm:$0xff] %vm36, %v154
  %171 = vst.msk [vmem:[%s3 + $0x28] sm:$0xff] %vm36, %v155
  %172 = vst.msk [vmem:[%s3 + $0x30] sm:$0xff] %vm36, %v156
  %173 = vst.msk [vmem:[%s3 + $0x38] sm:$0xff] %vm36, %v157
  %174 = vst.msk [vmem:[%s3 + $0x40] sm:$0xff] %vm36, %v158
  %175 = vst.msk [vmem:[%s3 + $0x48] sm:$0xff] %vm36, %v159
  %176 = vst.msk [vmem:[%s3 + $0x50] sm:$0xff] %vm36, %v160
  %177 = vst.msk [vmem:[%s3 + $0x58] sm:$0xff] %vm36, %v161
  %178 = vst.msk [vmem:[%s3 + $0x60] sm:$0xff] %vm36, %v162
  %179 = vst.msk [vmem:[%s3 + $0x68] sm:$0xff] %vm36, %v163
  %180 = vst.msk [vmem:[%s3 + $0x70] sm:$0xff] %vm36, %v164
  %181 = vst.msk [vmem:[%s3 + $0x78] sm:$0xff] %vm36, %v165
  // Predicated region
  $region14: #{down_forward.5} parent=0 // pred_check
    _
  $region15: #{down_forward.5} parent=0 // pred_check_branch
    %183 = sbr.rel (0) target = $region17
  $region16: #{down_forward.5} parent=0 // pred_region
    _
  $region17: #{down_forward.5} parent=0 // pred_fallthru
    _
  // Predicated region
  $region18: #{down_forward.5} parent=0 // pred_check
    _
  $region19: #{down_forward.5} parent=0 // pred_check_branch
    %185 = sbr.rel (0) target = $region21
  $region20: #{down_forward.5} parent=0 // pred_region
    _
  $region21: #{down_forward.5} parent=0 // pred_fallthru
    _

// kernel: down_forward.3
$region0: #{down_forward.3}
  #allocation0 [shape = 'u32[]', space=smem, size = 0x4, offset = 0x4, fixed_abs, tag = 'smem constant byte address 0x4 - core index']
  #allocation1 [shape = 'u32[72,128]{1,0:T(1,128)}', space=vmem, size = 0x9000, scoped, tag = 'internal scratch']
  %s0 = inlined_call_operand.vmem [shape: f32[2,9,9,8], index: 0, kind: input, shape index: {}]
  %s1 = inlined_call_operand.vmem [shape: f32[2,9,9,8], index: 1, kind: input, shape index: {}]
  %s2 = inlined_call_operand.vmem [shape: f32[2,9,9,8], index: 2, kind: input, shape index: {}]
  %s3 = inlined_call_operand.vmem [shape: f32[2,9,9,8], index: 3, kind: input, shape index: {}]
  %s4 = inlined_call_operand.vmem [shape: f32[72,16], index: 4, kind: input, shape index: {}]
  %s5 = inlined_call_operand.vmem [shape: f32[2,8,8,16], index: 5, kind: output, shape index: {0}]
  %s6 = inlined_call_operand.vmem [shape: f32[1,3,16], index: 6, kind: output, shape index: {1}]
  %7 = xla_tuple %s5, %s6
  %s8 = sld [smem:[#allocation0]]
  $region38: #{down_forward.3} parent=0
    _
  %s10 = ssub.s32 1, %s8
  %s11 = scalar_select 0, %s10, %s8
  // Predicated region
  $region2: #{down_forward.3} parent=0 // pred_check
    _
  $region3: #{down_forward.3} parent=0 // pred_check_branch
    %13 = sbr.rel (0) target = $region5
  $region4: #{down_forward.3} parent=0 // pred_region
    _
  $region5: #{down_forward.3} parent=0 // pred_fallthru
    _
  // Predicated region
  $region6: #{down_forward.3} parent=0 // pred_check
    _
  $region7: #{down_forward.3} parent=0 // pred_check_branch
    %15 = sbr.rel (0) target = $region9
  $region8: #{down_forward.3} parent=0 // pred_region
    _
  $region9: #{down_forward.3} parent=0 // pred_fallthru
    _
  // Predicated region
  $region10: #{down_forward.3} parent=0 // pred_check
    _
  $region11: #{down_forward.3} parent=0 // pred_check_branch
    %17 = sbr.rel (0) target = $region13
  $region12: #{down_forward.3} parent=0 // pred_region
    _
  $region13: #{down_forward.3} parent=0 // pred_fallthru
    _
  // Predicated region
  $region14: #{down_forward.3} parent=0 // pred_check
    _
  $region15: #{down_forward.3} parent=0 // pred_check_branch
    %19 = sbr.rel (0) target = $region17
  $region16: #{down_forward.3} parent=0 // pred_region
    _
  $region17: #{down_forward.3} parent=0 // pred_fallthru
    _
  // Predicated region
  $region18: #{down_forward.3} parent=0 // pred_check
    _
  $region19: #{down_forward.3} parent=0 // pred_check_branch
    %21 = sbr.rel (0) target = $region21
  $region20: #{down_forward.3} parent=0 // pred_region
    _
  $region21: #{down_forward.3} parent=0 // pred_fallthru
    _
  %v22 = vld [vmem:[%s0] sm:$0xff]
  %v23 = vld [vmem:[%s0 + $0x8] sm:$0x1]
  %v24 = vld [vmem:[%s0 + $0x10] sm:$0xff]
  %v25 = vld [vmem:[%s0 + $0x18] sm:$0x1]
  %v26 = vld [vmem:[%s0 + $0x20] sm:$0xff]
  %v27 = vld [vmem:[%s0 + $0x28] sm:$0x1]
  %v28 = vld [vmem:[%s0 + $0x30] sm:$0xff]
  %v29 = vld [vmem:[%s0 + $0x38] sm:$0x1]
  %v30 = vld [vmem:[%s0 + $0x40] sm:$0xff]
  %v31 = vld [vmem:[%s0 + $0x48] sm:$0x1]
  %v32 = vld [vmem:[%s0 + $0x50] sm:$0xff]
  %v33 = vld [vmem:[%s0 + $0x58] sm:$0x1]
  %v34 = vld [vmem:[%s0 + $0x60] sm:$0xff]
  %v35 = vld [vmem:[%s0 + $0x68] sm:$0x1]
  %v36 = vld [vmem:[%s0 + $0x70] sm:$0xff]
  %v37 = vld [vmem:[%s0 + $0x78] sm:$0x1]
  %v38 = vld [vmem:[%s0 + $0x80] sm:$0xff]
  %v39 = vld [vmem:[%s0 + $0x88] sm:$0x1]
  %v40 = vld [vmem:[%s0 + $0x90] sm:$0xff]
  %v41 = vld [vmem:[%s0 + $0x98] sm:$0x1]
  %v42 = vld [vmem:[%s0 + $0xa0] sm:$0xff]
  %v43 = vld [vmem:[%s0 + $0xa8] sm:$0x1]
  %v44 = vld [vmem:[%s0 + $0xb0] sm:$0xff]
  %v45 = vld [vmem:[%s0 + $0xb8] sm:$0x1]
  %v46 = vld [vmem:[%s0 + $0xc0] sm:$0xff]
  %v47 = vld [vmem:[%s0 + $0xc8] sm:$0x1]
  %v48 = vld [vmem:[%s0 + $0xd0] sm:$0xff]
  %v49 = vld [vmem:[%s0 + $0xd8] sm:$0x1]
  %v50 = vld [vmem:[%s0 + $0xe0] sm:$0xff]
  %v51 = vld [vmem:[%s0 + $0xe8] sm:$0x1]
  %v52 = vld [vmem:[%s0 + $0xf0] sm:$0xff]
  %v53 = vld [vmem:[%s0 + $0xf8] sm:$0x1]
  %v54 = vld [vmem:[%s0 + $0x100] sm:$0xff]
  %v55 = vld [vmem:[%s0 + $0x108] sm:$0x1]
  %v56 = vld [vmem:[%s0 + $0x110] sm:$0xff]
  %v57 = vld [vmem:[%s0 + $0x118] sm:$0x1]
  %v58 = vld [vmem:[%s1] sm:$0xff]
  %v59 = vld [vmem:[%s1 + $0x10] sm:$0xff]
  %v60 = vld [vmem:[%s1 + $0x20] sm:$0xff]
  %v61 = vld [vmem:[%s1 + $0x30] sm:$0xff]
  %v62 = vld [vmem:[%s1 + $0x40] sm:$0xff]
  %v63 = vld [vmem:[%s1 + $0x50] sm:$0xff]
  %v64 = vld [vmem:[%s1 + $0x60] sm:$0xff]
  %v65 = vld [vmem:[%s1 + $0x70] sm:$0xff]
  %v66 = vld [vmem:[%s1 + $0x80] sm:$0xff]
  %v67 = vld [vmem:[%s1 + $0x90] sm:$0xff]
  %v68 = vld [vmem:[%s1 + $0xa0] sm:$0xff]
  %v69 = vld [vmem:[%s1 + $0xb0] sm:$0xff]
  %v70 = vld [vmem:[%s1 + $0xc0] sm:$0xff]
  %v71 = vld [vmem:[%s1 + $0xd0] sm:$0xff]
  %v72 = vld [vmem:[%s1 + $0xe0] sm:$0xff]
  %v73 = vld [vmem:[%s1 + $0xf0] sm:$0xff]
  %v74 = vld [vmem:[%s1 + $0x100] sm:$0xff]
  %v75 = vld [vmem:[%s1 + $0x110] sm:$0xff]
  %v76 = vld [vmem:[%s2] sm:$0xff]
  %v77 = vld [vmem:[%s2 + $0x8] sm:$0x1]
  %v78 = vld [vmem:[%s2 + $0x10] sm:$0xff]
  %v79 = vld [vmem:[%s2 + $0x18] sm:$0x1]
  %v80 = vld [vmem:[%s2 + $0x20] sm:$0xff]
  %v81 = vld [vmem:[%s2 + $0x28] sm:$0x1]
  %v82 = vld [vmem:[%s2 + $0x30] sm:$0xff]
  %v83 = vld [vmem:[%s2 + $0x38] sm:$0x1]
  %v84 = vld [vmem:[%s2 + $0x40] sm:$0xff]
  %v85 = vld [vmem:[%s2 + $0x48] sm:$0x1]
  %v86 = vld [vmem:[%s2 + $0x50] sm:$0xff]
  %v87 = vld [vmem:[%s2 + $0x58] sm:$0x1]
  %v88 = vld [vmem:[%s2 + $0x60] sm:$0xff]
  %v89 = vld [vmem:[%s2 + $0x68] sm:$0x1]
  %v90 = vld [vmem:[%s2 + $0x70] sm:$0xff]
  %v91 = vld [vmem:[%s2 + $0x78] sm:$0x1]
  %v92 = vld [vmem:[%s2 + $0x90] sm:$0xff]
  %v93 = vld [vmem:[%s2 + $0x98] sm:$0x1]
  %v94 = vld [vmem:[%s2 + $0xa0] sm:$0xff]
  %v95 = vld [vmem:[%s2 + $0xa8] sm:$0x1]
  %v96 = vld [vmem:[%s2 + $0xb0] sm:$0xff]
  %v97 = vld [vmem:[%s2 + $0xb8] sm:$0x1]
  %v98 = vld [vmem:[%s2 + $0xc0] sm:$0xff]
  %v99 = vld [vmem:[%s2 + $0xc8] sm:$0x1]
  %v100 = vld [vmem:[%s2 + $0xd0] sm:$0xff]
  %v101 = vld [vmem:[%s2 + $0xd8] sm:$0x1]
  %v102 = vld [vmem:[%s2 + $0xe0] sm:$0xff]
  %v103 = vld [vmem:[%s2 + $0xe8] sm:$0x1]
  %v104 = vld [vmem:[%s2 + $0xf0] sm:$0xff]
  %v105 = vld [vmem:[%s2 + $0xf8] sm:$0x1]
  %v106 = vld [vmem:[%s2 + $0x100] sm:$0xff]
  %v107 = vld [vmem:[%s2 + $0x108] sm:$0x1]
  %v108 = vld [vmem:[%s3] sm:$0xff]
  %v109 = vld [vmem:[%s3 + $0x10] sm:$0xff]
  %v110 = vld [vmem:[%s3 + $0x20] sm:$0xff]
  %v111 = vld [vmem:[%s3 + $0x30] sm:$0xff]
  %v112 = vld [vmem:[%s3 + $0x40] sm:$0xff]
  %v113 = vld [vmem:[%s3 + $0x50] sm:$0xff]
  %v114 = vld [vmem:[%s3 + $0x60] sm:$0xff]
  %v115 = vld [vmem:[%s3 + $0x70] sm:$0xff]
  %v116 = vld [vmem:[%s3 + $0x90] sm:$0xff]
  %v117 = vld [vmem:[%s3 + $0xa0] sm:$0xff]
  %v118 = vld [vmem:[%s3 + $0xb0] sm:$0xff]
  %v119 = vld [vmem:[%s3 + $0xc0] sm:$0xff]
  %v120 = vld [vmem:[%s3 + $0xd0] sm:$0xff]
  %v121 = vld [vmem:[%s3 + $0xe0] sm:$0xff]
  %v122 = vld [vmem:[%s3 + $0xf0] sm:$0xff]
  %v123 = vld [vmem:[%s3 + $0x100] sm:$0xff]
  %vm156 = vcmask 1046528
  %v157 = vrot.slane %v22, 1
  %v158 = vrot.slane %v23, 1
  %v159 = vsel %vm156, %v157, %v158
  %v160 = vrot.slane %v24, 1
  %v161 = vrot.slane %v25, 1
  %v162 = vsel %vm156, %v160, %v161
  %v163 = vrot.slane %v26, 1
  %v164 = vrot.slane %v27, 1
  %v165 = vsel %vm156, %v163, %v164
  %v166 = vrot.slane %v28, 1
  %v167 = vrot.slane %v29, 1
  %v168 = vsel %vm156, %v166, %v167
  %v169 = vrot.slane %v30, 1
  %v170 = vrot.slane %v31, 1
  %v171 = vsel %vm156, %v169, %v170
  %v172 = vrot.slane %v32, 1
  %v173 = vrot.slane %v33, 1
  %v174 = vsel %vm156, %v172, %v173
  %v175 = vrot.slane %v34, 1
  %v176 = vrot.slane %v35, 1
  %v177 = vsel %vm156, %v175, %v176
  %v178 = vrot.slane %v36, 1
  %v179 = vrot.slane %v37, 1
  %v180 = vsel %vm156, %v178, %v179
  %v181 = vrot.slane %v40, 1
  %v182 = vrot.slane %v41, 1
  %v183 = vsel %vm156, %v181, %v182
  %v184 = vrot.slane %v42, 1
  %v185 = vrot.slane %v43, 1
  %v186 = vsel %vm156, %v184, %v185
  %v187 = vrot.slane %v44, 1
  %v188 = vrot.slane %v45, 1
  %v189 = vsel %vm156, %v187, %v188
  %v190 = vrot.slane %v46, 1
  %v191 = vrot.slane %v47, 1
  %v192 = vsel %vm156, %v190, %v191
  %v193 = vrot.slane %v48, 1
  %v194 = vrot.slane %v49, 1
  %v195 = vsel %vm156, %v193, %v194
  %v196 = vrot.slane %v50, 1
  %v197 = vrot.slane %v51, 1
  %v198 = vsel %vm156, %v196, %v197
  %v199 = vrot.slane %v52, 1
  %v200 = vrot.slane %v53, 1
  %v201 = vsel %vm156, %v199, %v200
  %v202 = vrot.slane %v54, 1
  %v203 = vrot.slane %v55, 1
  %v204 = vsel %vm156, %v202, %v203
  %v237 = vrot.slane %v76, 1
  %v238 = vrot.slane %v77, 1
  %v239 = vsel %vm156, %v237, %v238
  %v240 = vrot.slane %v78, 1
  %v241 = vrot.slane %v79, 1
  %v242 = vsel %vm156, %v240, %v241
  %v243 = vrot.slane %v80, 1
  %v244 = vrot.slane %v81, 1
  %v245 = vsel %vm156, %v243, %v244
  %v246 = vrot.slane %v82, 1
  %v247 = vrot.slane %v83, 1
  %v248 = vsel %vm156, %v246, %v247
  %v249 = vrot.slane %v84, 1
  %v250 = vrot.slane %v85, 1
  %v251 = vsel %vm156, %v249, %v250
  %v252 = vrot.slane %v86, 1
  %v253 = vrot.slane %v87, 1
  %v254 = vsel %vm156, %v252, %v253
  %v255 = vrot.slane %v88, 1
  %v256 = vrot.slane %v89, 1
  %v257 = vsel %vm156, %v255, %v256
  %v258 = vrot.slane %v90, 1
  %v259 = vrot.slane %v91, 1
  %v260 = vsel %vm156, %v258, %v259
  %v261 = vrot.slane %v92, 1
  %v262 = vrot.slane %v93, 1
  %v263 = vsel %vm156, %v261, %v262
  %v264 = vrot.slane %v94, 1
  %v265 = vrot.slane %v95, 1
  %v266 = vsel %vm156, %v264, %v265
  %v267 = vrot.slane %v96, 1
  %v268 = vrot.slane %v97, 1
  %v269 = vsel %vm156, %v267, %v268
  %v270 = vrot.slane %v98, 1
  %v271 = vrot.slane %v99, 1
  %v272 = vsel %vm156, %v270, %v271
  %v273 = vrot.slane %v100, 1
  %v274 = vrot.slane %v101, 1
  %v275 = vsel %vm156, %v273, %v274
  %v276 = vrot.slane %v102, 1
  %v277 = vrot.slane %v103, 1
  %v278 = vsel %vm156, %v276, %v277
  %v279 = vrot.slane %v104, 1
  %v280 = vrot.slane %v105, 1
  %v281 = vsel %vm156, %v279, %v280
  %v282 = vrot.slane %v106, 1
  %v283 = vrot.slane %v107, 1
  %v284 = vsel %vm156, %v282, %v283
  %v289 = vrot.slane %v38, 1
  %v290 = vrot.slane %v39, 1
  %v291 = vsel %vm156, %v289, %v290
  %v292 = vrot.slane %v56, 1
  %v293 = vrot.slane %v57, 1
  %v294 = vsel %vm156, %v292, %v293
  %311 = vrot.lane.b32.xlu0 %v58, 8
  %v312 = vpop.permute.xlu0 %311
  %313 = vrot.lane.b32.xlu0 %v59, 8
  %v314 = vpop.permute.xlu0 %313
  %315 = vrot.lane.b32.xlu0 %v60, 8
  %v316 = vpop.permute.xlu0 %315
  %317 = vrot.lane.b32.xlu0 %v61, 8
  %v318 = vpop.permute.xlu0 %317
  %319 = vrot.lane.b32.xlu0 %v62, 8
  %v320 = vpop.permute.xlu0 %319
  %321 = vrot.lane.b32.xlu0 %v63, 8
  %v322 = vpop.permute.xlu0 %321
  %323 = vrot.lane.b32.xlu0 %v64, 8
  %v324 = vpop.permute.xlu0 %323
  %325 = vrot.lane.b32.xlu0 %v65, 8
  %v326 = vpop.permute.xlu0 %325
  %327 = vrot.lane.b32.xlu0 %v67, 8
  %v328 = vpop.permute.xlu0 %327
  %329 = vrot.lane.b32.xlu0 %v68, 8
  %v330 = vpop.permute.xlu0 %329
  %331 = vrot.lane.b32.xlu0 %v69, 8
  %v332 = vpop.permute.xlu0 %331
  %333 = vrot.lane.b32.xlu0 %v70, 8
  %v334 = vpop.permute.xlu0 %333
  %335 = vrot.lane.b32.xlu0 %v71, 8
  %v336 = vpop.permute.xlu0 %335
  %337 = vrot.lane.b32.xlu0 %v72, 8
  %v338 = vpop.permute.xlu0 %337
  %339 = vrot.lane.b32.xlu0 %v73, 8
  %v340 = vpop.permute.xlu0 %339
  %341 = vrot.lane.b32.xlu0 %v74, 8
  %v342 = vpop.permute.xlu0 %341
  %359 = vrot.lane.b32.xlu0 %v159, 16
  %v360 = vpop.permute.xlu0 %359
  %361 = vrot.lane.b32.xlu0 %v162, 16
  %v362 = vpop.permute.xlu0 %361
  %363 = vrot.lane.b32.xlu0 %v165, 16
  %v364 = vpop.permute.xlu0 %363
  %365 = vrot.lane.b32.xlu0 %v168, 16
  %v366 = vpop.permute.xlu0 %365
  %367 = vrot.lane.b32.xlu0 %v171, 16
  %v368 = vpop.permute.xlu0 %367
  %369 = vrot.lane.b32.xlu0 %v174, 16
  %v370 = vpop.permute.xlu0 %369
  %371 = vrot.lane.b32.xlu0 %v177, 16
  %v372 = vpop.permute.xlu0 %371
  %373 = vrot.lane.b32.xlu0 %v180, 16
  %v374 = vpop.permute.xlu0 %373
  %375 = vrot.lane.b32.xlu0 %v183, 16
  %v376 = vpop.permute.xlu0 %375
  %377 = vrot.lane.b32.xlu0 %v186, 16
  %v378 = vpop.permute.xlu0 %377
  %379 = vrot.lane.b32.xlu0 %v189, 16
  %v380 = vpop.permute.xlu0 %379
  %381 = vrot.lane.b32.xlu0 %v192, 16
  %v382 = vpop.permute.xlu0 %381
  %383 = vrot.lane.b32.xlu0 %v195, 16
  %v384 = vpop.permute.xlu0 %383
  %385 = vrot.lane.b32.xlu0 %v198, 16
  %v386 = vpop.permute.xlu0 %385
  %387 = vrot.lane.b32.xlu0 %v201, 16
  %v388 = vpop.permute.xlu0 %387
  %389 = vrot.lane.b32.xlu0 %v204, 16
  %v390 = vpop.permute.xlu0 %389
  %407 = vrot.lane.b32.xlu0 %v76, 24
  %v408 = vpop.permute.xlu0 %407
  %409 = vrot.lane.b32.xlu0 %v78, 24
  %v410 = vpop.permute.xlu0 %409
  %411 = vrot.lane.b32.xlu0 %v80, 24
  %v412 = vpop.permute.xlu0 %411
  %413 = vrot.lane.b32.xlu0 %v82, 24
  %v414 = vpop.permute.xlu0 %413
  %415 = vrot.lane.b32.xlu0 %v84, 24
  %v416 = vpop.permute.xlu0 %415
  %417 = vrot.lane.b32.xlu0 %v86, 24
  %v418 = vpop.permute.xlu0 %417
  %419 = vrot.lane.b32.xlu0 %v88, 24
  %v420 = vpop.permute.xlu0 %419
  %421 = vrot.lane.b32.xlu0 %v90, 24
  %v422 = vpop.permute.xlu0 %421
  %423 = vrot.lane.b32.xlu0 %v92, 24
  %v424 = vpop.permute.xlu0 %423
  %425 = vrot.lane.b32.xlu0 %v94, 24
  %v426 = vpop.permute.xlu0 %425
  %427 = vrot.lane.b32.xlu0 %v96, 24
  %v428 = vpop.permute.xlu0 %427
  %429 = vrot.lane.b32.xlu0 %v98, 24
  %v430 = vpop.permute.xlu0 %429
  %431 = vrot.lane.b32.xlu0 %v100, 24
  %v432 = vpop.permute.xlu0 %431
  %433 = vrot.lane.b32.xlu0 %v102, 24
  %v434 = vpop.permute.xlu0 %433
  %435 = vrot.lane.b32.xlu0 %v104, 24
  %v436 = vpop.permute.xlu0 %435
  %437 = vrot.lane.b32.xlu0 %v106, 24
  %v438 = vpop.permute.xlu0 %437
  %471 = vrot.lane.b32.xlu0 %v108, 32
  %v472 = vpop.permute.xlu0 %471
  %473 = vrot.lane.b32.xlu0 %v109, 32
  %v474 = vpop.permute.xlu0 %473
  %475 = vrot.lane.b32.xlu0 %v110, 32
  %v476 = vpop.permute.xlu0 %475
  %477 = vrot.lane.b32.xlu0 %v111, 32
  %v478 = vpop.permute.xlu0 %477
  %479 = vrot.lane.b32.xlu0 %v112, 32
  %v480 = vpop.permute.xlu0 %479
  %481 = vrot.lane.b32.xlu0 %v113, 32
  %v482 = vpop.permute.xlu0 %481
  %483 = vrot.lane.b32.xlu0 %v114, 32
  %v484 = vpop.permute.xlu0 %483
  %485 = vrot.lane.b32.xlu0 %v115, 32
  %v486 = vpop.permute.xlu0 %485
  %487 = vrot.lane.b32.xlu0 %v116, 32
  %v488 = vpop.permute.xlu0 %487
  %489 = vrot.lane.b32.xlu0 %v117, 32
  %v490 = vpop.permute.xlu0 %489
  %491 = vrot.lane.b32.xlu0 %v118, 32
  %v492 = vpop.permute.xlu0 %491
  %493 = vrot.lane.b32.xlu0 %v119, 32
  %v494 = vpop.permute.xlu0 %493
  %495 = vrot.lane.b32.xlu0 %v120, 32
  %v496 = vpop.permute.xlu0 %495
  %497 = vrot.lane.b32.xlu0 %v121, 32
  %v498 = vpop.permute.xlu0 %497
  %499 = vrot.lane.b32.xlu0 %v122, 32
  %v500 = vpop.permute.xlu0 %499
  %501 = vrot.lane.b32.xlu0 %v123, 32
  %v502 = vpop.permute.xlu0 %501
  %519 = vrot.lane.b32.xlu0 %v239, 40
  %v520 = vpop.permute.xlu0 %519
  %521 = vrot.lane.b32.xlu0 %v242, 40
  %v522 = vpop.permute.xlu0 %521
  %523 = vrot.lane.b32.xlu0 %v245, 40
  %v524 = vpop.permute.xlu0 %523
  %525 = vrot.lane.b32.xlu0 %v248, 40
  %v526 = vpop.permute.xlu0 %525
  %527 = vrot.lane.b32.xlu0 %v251, 40
  %v528 = vpop.permute.xlu0 %527
  %529 = vrot.lane.b32.xlu0 %v254, 40
  %v530 = vpop.permute.xlu0 %529
  %531 = vrot.lane.b32.xlu0 %v257, 40
  %v532 = vpop.permute.xlu0 %531
  %533 = vrot.lane.b32.xlu0 %v260, 40
  %v534 = vpop.permute.xlu0 %533
  %535 = vrot.lane.b32.xlu0 %v263, 40
  %v536 = vpop.permute.xlu0 %535
  %537 = vrot.lane.b32.xlu0 %v266, 40
  %v538 = vpop.permute.xlu0 %537
  %539 = vrot.lane.b32.xlu0 %v269, 40
  %v540 = vpop.permute.xlu0 %539
  %541 = vrot.lane.b32.xlu0 %v272, 40
  %v542 = vpop.permute.xlu0 %541
  %543 = vrot.lane.b32.xlu0 %v275, 40
  %v544 = vpop.permute.xlu0 %543
  %545 = vrot.lane.b32.xlu0 %v278, 40
  %v546 = vpop.permute.xlu0 %545
  %547 = vrot.lane.b32.xlu0 %v281, 40
  %v548 = vpop.permute.xlu0 %547
  %549 = vrot.lane.b32.xlu0 %v284, 40
  %v550 = vpop.permute.xlu0 %549
  %567 = vrot.lane.b32.xlu0 %v24, 48
  %v568 = vpop.permute.xlu0 %567
  %569 = vrot.lane.b32.xlu0 %v26, 48
  %v570 = vpop.permute.xlu0 %569
  %571 = vrot.lane.b32.xlu0 %v28, 48
  %v572 = vpop.permute.xlu0 %571
  %573 = vrot.lane.b32.xlu0 %v30, 48
  %v574 = vpop.permute.xlu0 %573
  %575 = vrot.lane.b32.xlu0 %v32, 48
  %v576 = vpop.permute.xlu0 %575
  %577 = vrot.lane.b32.xlu0 %v34, 48
  %v578 = vpop.permute.xlu0 %577
  %579 = vrot.lane.b32.xlu0 %v36, 48
  %v580 = vpop.permute.xlu0 %579
  %581 = vrot.lane.b32.xlu0 %v38, 48
  %v582 = vpop.permute.xlu0 %581
  %583 = vrot.lane.b32.xlu0 %v42, 48
  %v584 = vpop.permute.xlu0 %583
  %585 = vrot.lane.b32.xlu0 %v44, 48
  %v586 = vpop.permute.xlu0 %585
  %587 = vrot.lane.b32.xlu0 %v46, 48
  %v588 = vpop.permute.xlu0 %587
  %589 = vrot.lane.b32.xlu0 %v48, 48
  %v590 = vpop.permute.xlu0 %589
  %591 = vrot.lane.b32.xlu0 %v50, 48
  %v592 = vpop.permute.xlu0 %591
  %593 = vrot.lane.b32.xlu0 %v52, 48
  %v594 = vpop.permute.xlu0 %593
  %595 = vrot.lane.b32.xlu0 %v54, 48
  %v596 = vpop.permute.xlu0 %595
  %597 = vrot.lane.b32.xlu0 %v56, 48
  %v598 = vpop.permute.xlu0 %597
  %617 = vrot.lane.b32.xlu0 %v59, 56
  %v618 = vpop.permute.xlu0 %617
  %619 = vrot.lane.b32.xlu0 %v60, 56
  %v620 = vpop.permute.xlu0 %619
  %621 = vrot.lane.b32.xlu0 %v61, 56
  %v622 = vpop.permute.xlu0 %621
  %623 = vrot.lane.b32.xlu0 %v62, 56
  %v624 = vpop.permute.xlu0 %623
  %625 = vrot.lane.b32.xlu0 %v63, 56
  %v626 = vpop.permute.xlu0 %625
  %627 = vrot.lane.b32.xlu0 %v64, 56
  %v628 = vpop.permute.xlu0 %627
  %629 = vrot.lane.b32.xlu0 %v65, 56
  %v630 = vpop.permute.xlu0 %629
  %631 = vrot.lane.b32.xlu0 %v66, 56
  %v632 = vpop.permute.xlu0 %631
  %633 = vrot.lane.b32.xlu0 %v68, 56
  %v634 = vpop.permute.xlu0 %633
  %635 = vrot.lane.b32.xlu0 %v69, 56
  %v636 = vpop.permute.xlu0 %635
  %637 = vrot.lane.b32.xlu0 %v70, 56
  %v638 = vpop.permute.xlu0 %637
  %639 = vrot.lane.b32.xlu0 %v71, 56
  %v640 = vpop.permute.xlu0 %639
  %641 = vrot.lane.b32.xlu0 %v72, 56
  %v642 = vpop.permute.xlu0 %641
  %643 = vrot.lane.b32.xlu0 %v73, 56
  %v644 = vpop.permute.xlu0 %643
  %645 = vrot.lane.b32.xlu0 %v74, 56
  %v646 = vpop.permute.xlu0 %645
  %647 = vrot.lane.b32.xlu0 %v75, 56
  %v648 = vpop.permute.xlu0 %647
  %665 = vrot.lane.b32.xlu0 %v162, 64
  %v666 = vpop.permute.xlu0 %665
  %667 = vrot.lane.b32.xlu0 %v165, 64
  %v668 = vpop.permute.xlu0 %667
  %669 = vrot.lane.b32.xlu0 %v168, 64
  %v670 = vpop.permute.xlu0 %669
  %671 = vrot.lane.b32.xlu0 %v171, 64
  %v672 = vpop.permute.xlu0 %671
  %673 = vrot.lane.b32.xlu0 %v174, 64
  %v674 = vpop.permute.xlu0 %673
  %675 = vrot.lane.b32.xlu0 %v177, 64
  %v676 = vpop.permute.xlu0 %675
  %677 = vrot.lane.b32.xlu0 %v180, 64
  %v678 = vpop.permute.xlu0 %677
  %679 = vrot.lane.b32.xlu0 %v291, 64
  %v680 = vpop.permute.xlu0 %679
  %681 = vrot.lane.b32.xlu0 %v186, 64
  %v682 = vpop.permute.xlu0 %681
  %683 = vrot.lane.b32.xlu0 %v189, 64
  %v684 = vpop.permute.xlu0 %683
  %685 = vrot.lane.b32.xlu0 %v192, 64
  %v686 = vpop.permute.xlu0 %685
  %687 = vrot.lane.b32.xlu0 %v195, 64
  %v688 = vpop.permute.xlu0 %687
  %689 = vrot.lane.b32.xlu0 %v198, 64
  %v690 = vpop.permute.xlu0 %689
  %691 = vrot.lane.b32.xlu0 %v201, 64
  %v692 = vpop.permute.xlu0 %691
  %693 = vrot.lane.b32.xlu0 %v204, 64
  %v694 = vpop.permute.xlu0 %693
  %695 = vrot.lane.b32.xlu0 %v294, 64
  %v696 = vpop.permute.xlu0 %695
  %vm713 = vcmask 64512
  %v714 = vsel %vm713, %v22, %v312
  %v715 = vsel %vm713, %v24, %v314
  %v716 = vsel %vm713, %v26, %v316
  %v717 = vsel %vm713, %v28, %v318
  %v718 = vsel %vm713, %v30, %v320
  %v719 = vsel %vm713, %v32, %v322
  %v720 = vsel %vm713, %v34, %v324
  %v721 = vsel %vm713, %v36, %v326
  %v722 = vsel %vm713, %v40, %v328
  %v723 = vsel %vm713, %v42, %v330
  %v724 = vsel %vm713, %v44, %v332
  %v725 = vsel %vm713, %v46, %v334
  %v726 = vsel %vm713, %v48, %v336
  %v727 = vsel %vm713, %v50, %v338
  %v728 = vsel %vm713, %v52, %v340
  %v729 = vsel %vm713, %v54, %v342
  %vm730 = vcmask 130048
  %v731 = vsel %vm730, %v714, %v360
  %v732 = vsel %vm730, %v715, %v362
  %v733 = vsel %vm730, %v716, %v364
  %v734 = vsel %vm730, %v717, %v366
  %v735 = vsel %vm730, %v718, %v368
  %v736 = vsel %vm730, %v719, %v370
  %v737 = vsel %vm730, %v720, %v372
  %v738 = vsel %vm730, %v721, %v374
  %v739 = vsel %vm730, %v722, %v376
  %v740 = vsel %vm730, %v723, %v378
  %v741 = vsel %vm730, %v724, %v380
  %v742 = vsel %vm730, %v725, %v382
  %v743 = vsel %vm730, %v726, %v384
  %v744 = vsel %vm730, %v727, %v386
  %v745 = vsel %vm730, %v728, %v388
  %v746 = vsel %vm730, %v729, %v390
  %vm747 = vcmask 195584
  %v748 = vsel %vm747, %v731, %v408
  %v749 = vsel %vm747, %v732, %v410
  %v750 = vsel %vm747, %v733, %v412
  %v751 = vsel %vm747, %v734, %v414
  %v752 = vsel %vm747, %v735, %v416
  %v753 = vsel %vm747, %v736, %v418
  %v754 = vsel %vm747, %v737, %v420
  %v755 = vsel %vm747, %v738, %v422
  %v756 = vsel %vm747, %v739, %v424
  %v757 = vsel %vm747, %v740, %v426
  %v758 = vsel %vm747, %v741, %v428
  %v759 = vsel %vm747, %v742, %v430
  %v760 = vsel %vm747, %v743, %v432
  %v761 = vsel %vm747, %v744, %v434
  %v762 = vsel %vm747, %v745, %v436
  %v763 = vsel %vm747, %v746, %v438
  %vm764 = vcmask 261120
  %v765 = vsel %vm764, %v748, %v472
  %v766 = vsel %vm764, %v749, %v474
  %v767 = vsel %vm764, %v750, %v476
  %v768 = vsel %vm764, %v751, %v478
  %v769 = vsel %vm764, %v752, %v480
  %v770 = vsel %vm764, %v753, %v482
  %v771 = vsel %vm764, %v754, %v484
  %v772 = vsel %vm764, %v755, %v486
  %v773 = vsel %vm764, %v756, %v488
  %v774 = vsel %vm764, %v757, %v490
  %v775 = vsel %vm764, %v758, %v492
  %v776 = vsel %vm764, %v759, %v494
  %v777 = vsel %vm764, %v760, %v496
  %v778 = vsel %vm764, %v761, %v498
  %v779 = vsel %vm764, %v762, %v500
  %v780 = vsel %vm764, %v763, %v502
  %vm781 = vcmask 326656
  %v782 = vsel %vm781, %v765, %v520
  %v783 = vsel %vm781, %v766, %v522
  %v784 = vsel %vm781, %v767, %v524
  %v785 = vsel %vm781, %v768, %v526
  %v786 = vsel %vm781, %v769, %v528
  %v787 = vsel %vm781, %v770, %v530
  %v788 = vsel %vm781, %v771, %v532
  %v789 = vsel %vm781, %v772, %v534
  %v790 = vsel %vm781, %v773, %v536
  %v791 = vsel %vm781, %v774, %v538
  %v792 = vsel %vm781, %v775, %v540
  %v793 = vsel %vm781, %v776, %v542
  %v794 = vsel %vm781, %v777, %v544
  %v795 = vsel %vm781, %v778, %v546
  %v796 = vsel %vm781, %v779, %v548
  %v797 = vsel %vm781, %v780, %v550
  %vm798 = vcmask 392192
  %v799 = vsel %vm798, %v782, %v568
  %v800 = vsel %vm798, %v783, %v570
  %v801 = vsel %vm798, %v784, %v572
  %v802 = vsel %vm798, %v785, %v574
  %v803 = vsel %vm798, %v786, %v576
  %v804 = vsel %vm798, %v787, %v578
  %v805 = vsel %vm798, %v788, %v580
  %v806 = vsel %vm798, %v789, %v582
  %v807 = vsel %vm798, %v790, %v584
  %v808 = vsel %vm798, %v791, %v586
  %v809 = vsel %vm798, %v792, %v588
  %v810 = vsel %vm798, %v793, %v590
  %v811 = vsel %vm798, %v794, %v592
  %v812 = vsel %vm798, %v795, %v594
  %v813 = vsel %vm798, %v796, %v596
  %v814 = vsel %vm798, %v797, %v598
  %vm815 = vcmask 457728
  %v816 = vsel %vm815, %v799, %v618
  %v817 = vsel %vm815, %v800, %v620
  %v818 = vsel %vm815, %v801, %v622
  %v819 = vsel %vm815, %v802, %v624
  %v820 = vsel %vm815, %v803, %v626
  %v821 = vsel %vm815, %v804, %v628
  %v822 = vsel %vm815, %v805, %v630
  %v823 = vsel %vm815, %v806, %v632
  %v824 = vsel %vm815, %v807, %v634
  %v825 = vsel %vm815, %v808, %v636
  %v826 = vsel %vm815, %v809, %v638
  %v827 = vsel %vm815, %v810, %v640
  %v828 = vsel %vm815, %v811, %v642
  %v829 = vsel %vm815, %v812, %v644
  %v830 = vsel %vm815, %v813, %v646
  %v831 = vsel %vm815, %v814, %v648
  %vm832 = vcmask 523264
  %v833 = vsel %vm832, %v816, %v666
  %v834 = vsel %vm832, %v817, %v668
  %v835 = vsel %vm832, %v818, %v670
  %v836 = vsel %vm832, %v819, %v672
  %v837 = vsel %vm832, %v820, %v674
  %v838 = vsel %vm832, %v821, %v676
  %v839 = vsel %vm832, %v822, %v678
  %v840 = vsel %vm832, %v823, %v680
  %v841 = vsel %vm832, %v824, %v682
  %v842 = vsel %vm832, %v825, %v684
  %v843 = vsel %vm832, %v826, %v686
  %v844 = vsel %vm832, %v827, %v688
  %v845 = vsel %vm832, %v828, %v690
  %v846 = vsel %vm832, %v829, %v692
  %v847 = vsel %vm832, %v830, %v694
  %v848 = vsel %vm832, %v831, %v696
  %v849 = vld [vmem:[%s4] sm:$0xff]
  %v850 = vld [vmem:[%s4 + $0x8] sm:$0xff]
  %v851 = vld [vmem:[%s4 + $0x10] sm:$0xff]
  %v852 = vld [vmem:[%s4 + $0x18] sm:$0xff]
  %v853 = vld [vmem:[%s4 + $0x20] sm:$0xff]
  %v854 = vld [vmem:[%s4 + $0x28] sm:$0xff]
  %v855 = vld [vmem:[%s4 + $0x30] sm:$0xff]
  %v856 = vld [vmem:[%s4 + $0x38] sm:$0xff]
  %v857 = vld [vmem:[%s4 + $0x40] sm:$0xff]
  %vm858 = vcmask 588800
  %v860 = vsel %vm858, %v833, 0
  %v863 = vsel %vm858, %v834, 0
  %v866 = vsel %vm858, %v835, 0
  %v869 = vsel %vm858, %v836, 0
  %v872 = vsel %vm858, %v837, 0
  %v875 = vsel %vm858, %v838, 0
  %v878 = vsel %vm858, %v839, 0
  %v881 = vsel %vm858, %v840, 0
  %v884 = vsel %vm858, %v841, 0
  %v887 = vsel %vm858, %v842, 0
  %v890 = vsel %vm858, %v843, 0
  %v893 = vsel %vm858, %v844, 0
  %v896 = vsel %vm858, %v845, 0
  %v899 = vsel %vm858, %v846, 0
  %v902 = vsel %vm858, %v847, 0
  %v905 = vsel %vm858, %v848, 0
  %907 = vmatpush.msra.mxu0 0.0
  %908 = vmatpush.msra.mxu0 0.0
  %909 = vmatpush.msra.mxu0 0.0
  %910 = vmatpush.msra.mxu0 0.0
  %911 = vmatpush.msra.mxu0 0.0
  %912 = vmatpush.msra.mxu0 0.0
  %913 = vmatpush.msra.mxu0 0.0
  %914 = vmatpush.msra.mxu0 %v857
  %915 = vmatpush.msra.mxu0 %v856
  %916 = vmatpush.msra.mxu0 %v855
  %917 = vmatpush.msra.mxu0 %v854
  %918 = vmatpush.msra.mxu0 %v853
  %919 = vmatpush.msra.mxu0 %v852
  %920 = vmatpush.msra.mxu0 %v851
  %921 = vmatpush.msra.mxu0 %v850
  %922 = vmatpush.msra.mxu0 %v849
  %923 = vmatmul.f32.gmra.mxu0 %v860
  %v924 = vpop.f32.mrf.mxu0
  %v925 = vadd.f32 0.0, %v924
  %926 = vmatmul.f32.gmra.mxu0 %v863
  %v927 = vpop.f32.mrf.mxu0
  %v928 = vadd.f32 0.0, %v927
  %929 = vmatmul.f32.gmra.mxu0 %v866
  %v930 = vpop.f32.mrf.mxu0
  %v931 = vadd.f32 0.0, %v930
  %932 = vmatmul.f32.gmra.mxu0 %v869
  %v933 = vpop.f32.mrf.mxu0
  %v934 = vadd.f32 0.0, %v933
  %935 = vmatmul.f32.gmra.mxu0 %v872
  %v936 = vpop.f32.mrf.mxu0
  %v937 = vadd.f32 0.0, %v936
  %938 = vmatmul.f32.gmra.mxu0 %v875
  %v939 = vpop.f32.mrf.mxu0
  %v940 = vadd.f32 0.0, %v939
  %941 = vmatmul.f32.gmra.mxu0 %v878
  %v942 = vpop.f32.mrf.mxu0
  %v943 = vadd.f32 0.0, %v942
  %944 = vmatmul.f32.gmra.mxu0 %v881
  %v945 = vpop.f32.mrf.mxu0
  %v946 = vadd.f32 0.0, %v945
  %947 = vmatmul.f32.gmra.mxu0 %v884
  %v948 = vpop.f32.mrf.mxu0
  %v949 = vadd.f32 0.0, %v948
  %950 = vmatmul.f32.gmra.mxu0 %v887
  %v951 = vpop.f32.mrf.mxu0
  %v952 = vadd.f32 0.0, %v951
  %953 = vmatmul.f32.gmra.mxu0 %v890
  %v954 = vpop.f32.mrf.mxu0
  %v955 = vadd.f32 0.0, %v954
  %956 = vmatmul.f32.gmra.mxu0 %v893
  %v957 = vpop.f32.mrf.mxu0
  %v958 = vadd.f32 0.0, %v957
  %959 = vmatmul.f32.gmra.mxu0 %v896
  %v960 = vpop.f32.mrf.mxu0
  %v961 = vadd.f32 0.0, %v960
  %962 = vmatmul.f32.gmra.mxu0 %v899
  %v963 = vpop.f32.mrf.mxu0
  %v964 = vadd.f32 0.0, %v963
  %965 = vmatmul.f32.gmra.mxu0 %v902
  %v966 = vpop.f32.mrf.mxu0
  %v967 = vadd.f32 0.0, %v966
  %968 = vmatmul.f32.gmra.mxu0 %v905
  %v969 = vpop.f32.mrf.mxu0
  %v970 = vadd.f32 0.0, %v969
  %971 = vdwg.mxu0
  %972 = vst.msk [vmem:[%s5] sm:$0xff] %vm730, %v925
  %973 = vst.msk [vmem:[%s5 + $0x8] sm:$0xff] %vm730, %v928
  %974 = vst.msk [vmem:[%s5 + $0x10] sm:$0xff] %vm730, %v931
  %975 = vst.msk [vmem:[%s5 + $0x18] sm:$0xff] %vm730, %v934
  %976 = vst.msk [vmem:[%s5 + $0x20] sm:$0xff] %vm730, %v937
  %977 = vst.msk [vmem:[%s5 + $0x28] sm:$0xff] %vm730, %v940
  %978 = vst.msk [vmem:[%s5 + $0x30] sm:$0xff] %vm730, %v943
  %979 = vst.msk [vmem:[%s5 + $0x38] sm:$0xff] %vm730, %v946
  %980 = vst.msk [vmem:[%s5 + $0x40] sm:$0xff] %vm730, %v949
  %981 = vst.msk [vmem:[%s5 + $0x48] sm:$0xff] %vm730, %v952
  %982 = vst.msk [vmem:[%s5 + $0x50] sm:$0xff] %vm730, %v955
  %983 = vst.msk [vmem:[%s5 + $0x58] sm:$0xff] %vm730, %v958
  %984 = vst.msk [vmem:[%s5 + $0x60] sm:$0xff] %vm730, %v961
  %985 = vst.msk [vmem:[%s5 + $0x68] sm:$0xff] %vm730, %v964
  %986 = vst.msk [vmem:[%s5 + $0x70] sm:$0xff] %vm730, %v967
  %987 = vst.msk [vmem:[%s5 + $0x78] sm:$0xff] %vm730, %v970
  %v988 = vsel %vm730, %v925, 0.0
  %v989 = vsel %vm730, %v928, 0.0
  %v990 = vadd.f32 %v988, %v989
  %v991 = vsel %vm730, %v931, 0.0
  %v992 = vadd.f32 %v990, %v991
  %v993 = vsel %vm730, %v934, 0.0
  %v994 = vadd.f32 %v992, %v993
  %v995 = vsel %vm730, %v937, 0.0
  %v996 = vadd.f32 %v994, %v995
  %v997 = vsel %vm730, %v940, 0.0
  %v998 = vadd.f32 %v996, %v997
  %v999 = vsel %vm730, %v943, 0.0
  %v1000 = vadd.f32 %v998, %v999
  %v1001 = vsel %vm730, %v946, 0.0
  %v1002 = vadd.f32 %v1000, %v1001
  %v1003 = vsel %vm730, %v949, 0.0
  %v1004 = vadd.f32 %v1002, %v1003
  %v1005 = vsel %vm730, %v952, 0.0
  %v1006 = vadd.f32 %v1004, %v1005
  %v1007 = vsel %vm730, %v955, 0.0
  %v1008 = vadd.f32 %v1006, %v1007
  %v1009 = vsel %vm730, %v958, 0.0
  %v1010 = vadd.f32 %v1008, %v1009
  %v1011 = vsel %vm730, %v961, 0.0
  %v1012 = vadd.f32 %v1010, %v1011
  %v1013 = vsel %vm730, %v964, 0.0
  %v1014 = vadd.f32 %v1012, %v1013
  %v1015 = vsel %vm730, %v967, 0.0
  %v1016 = vadd.f32 %v1014, %v1015
  %v1017 = vsel %vm730, %v970, 0.0
  %v1018 = vadd.f32 %v1016, %v1017
  %v1019 = vrot.slane %v1018, 4
  %v1020 = vadd.f32 %v1018, %v1019
  %v1021 = vrot.slane %v1020, 2
  %v1022 = vadd.f32 %v1020, %v1021
  %v1023 = vrot.slane %v1022, 1
  %v1024 = vadd.f32 %v1022, %v1023
  %v1025 = vmul.f32 %v925, %v925
  %v1026 = vmul.f32 %v928, %v928
  %v1027 = vmul.f32 %v931, %v931
  %v1028 = vmul.f32 %v934, %v934
  %v1029 = vmul.f32 %v937, %v937
  %v1030 = vmul.f32 %v940, %v940
  %v1031 = vmul.f32 %v943, %v943
  %v1032 = vmul.f32 %v946, %v946
  %v1033 = vmul.f32 %v949, %v949
  %v1034 = vmul.f32 %v952, %v952
  %v1035 = vmul.f32 %v955, %v955
  %v1036 = vmul.f32 %v958, %v958
  %v1037 = vmul.f32 %v961, %v961
  %v1038 = vmul.f32 %v964, %v964
  %v1039 = vmul.f32 %v967, %v967
  %v1040 = vmul.f32 %v970, %v970
  %v1041 = vsel %vm730, %v1025, 0.0
  %v1042 = vsel %vm730, %v1026, 0.0
  %v1043 = vadd.f32 %v1041, %v1042
  %v1044 = vsel %vm730, %v1027, 0.0
  %v1045 = vadd.f32 %v1043, %v1044
  %v1046 = vsel %vm730, %v1028, 0.0
  %v1047 = vadd.f32 %v1045, %v1046
  %v1048 = vsel %vm730, %v1029, 0.0
  %v1049 = vadd.f32 %v1047, %v1048
  %v1050 = vsel %vm730, %v1030, 0.0
  %v1051 = vadd.f32 %v1049, %v1050
  %v1052 = vsel %vm730, %v1031, 0.0
  %v1053 = vadd.f32 %v1051, %v1052
  %v1054 = vsel %vm730, %v1032, 0.0
  %v1055 = vadd.f32 %v1053, %v1054
  %v1056 = vsel %vm730, %v1033, 0.0
  %v1057 = vadd.f32 %v1055, %v1056
  %v1058 = vsel %vm730, %v1034, 0.0
  %v1059 = vadd.f32 %v1057, %v1058
  %v1060 = vsel %vm730, %v1035, 0.0
  %v1061 = vadd.f32 %v1059, %v1060
  %v1062 = vsel %vm730, %v1036, 0.0
  %v1063 = vadd.f32 %v1061, %v1062
  %v1064 = vsel %vm730, %v1037, 0.0
  %v1065 = vadd.f32 %v1063, %v1064
  %v1066 = vsel %vm730, %v1038, 0.0
  %v1067 = vadd.f32 %v1065, %v1066
  %v1068 = vsel %vm730, %v1039, 0.0
  %v1069 = vadd.f32 %v1067, %v1068
  %v1070 = vsel %vm730, %v1040, 0.0
  %v1071 = vadd.f32 %v1069, %v1070
  %v1072 = vrot.slane %v1071, 4
  %v1073 = vadd.f32 %v1071, %v1072
  %v1074 = vrot.slane %v1073, 2
  %v1075 = vadd.f32 %v1073, %v1074
  %v1076 = vrot.slane %v1075, 1
  %v1077 = vadd.f32 %v1075, %v1076
  %1094 = vrot.lane.b32.xlu0 %v925, 120
  %v1095 = vpop.permute.xlu0 %1094
  %1096 = vrot.lane.b32.xlu0 %v928, 120
  %v1097 = vpop.permute.xlu0 %1096
  %1098 = vrot.lane.b32.xlu0 %v931, 120
  %v1099 = vpop.permute.xlu0 %1098
  %1100 = vrot.lane.b32.xlu0 %v934, 120
  %v1101 = vpop.permute.xlu0 %1100
  %1102 = vrot.lane.b32.xlu0 %v937, 120
  %v1103 = vpop.permute.xlu0 %1102
  %1104 = vrot.lane.b32.xlu0 %v940, 120
  %v1105 = vpop.permute.xlu0 %1104
  %1106 = vrot.lane.b32.xlu0 %v943, 120
  %v1107 = vpop.permute.xlu0 %1106
  %1108 = vrot.lane.b32.xlu0 %v946, 120
  %v1109 = vpop.permute.xlu0 %1108
  %1110 = vrot.lane.b32.xlu0 %v949, 120
  %v1111 = vpop.permute.xlu0 %1110
  %1112 = vrot.lane.b32.xlu0 %v952, 120
  %v1113 = vpop.permute.xlu0 %1112
  %1114 = vrot.lane.b32.xlu0 %v955, 120
  %v1115 = vpop.permute.xlu0 %1114
  %1116 = vrot.lane.b32.xlu0 %v958, 120
  %v1117 = vpop.permute.xlu0 %1116
  %1118 = vrot.lane.b32.xlu0 %v961, 120
  %v1119 = vpop.permute.xlu0 %1118
  %1120 = vrot.lane.b32.xlu0 %v964, 120
  %v1121 = vpop.permute.xlu0 %1120
  %1122 = vrot.lane.b32.xlu0 %v967, 120
  %v1123 = vpop.permute.xlu0 %1122
  %1124 = vrot.lane.b32.xlu0 %v970, 120
  %v1125 = vpop.permute.xlu0 %1124
  %v1142 = vmul.f32 %v925, %v1095
  %v1143 = vmul.f32 %v928, %v1097
  %v1144 = vmul.f32 %v931, %v1099
  %v1145 = vmul.f32 %v934, %v1101
  %v1146 = vmul.f32 %v937, %v1103
  %v1147 = vmul.f32 %v940, %v1105
  %v1148 = vmul.f32 %v943, %v1107
  %v1149 = vmul.f32 %v946, %v1109
  %v1150 = vmul.f32 %v949, %v1111
  %v1151 = vmul.f32 %v952, %v1113
  %v1152 = vmul.f32 %v955, %v1115
  %v1153 = vmul.f32 %v958, %v1117
  %v1154 = vmul.f32 %v961, %v1119
  %v1155 = vmul.f32 %v964, %v1121
  %v1156 = vmul.f32 %v967, %v1123
  %v1157 = vmul.f32 %v970, %v1125
  %v1158 = vsel %vm713, %v1142, 0.0
  %v1159 = vsel %vm713, %v1143, 0.0
  %v1160 = vadd.f32 %v1158, %v1159
  %v1161 = vsel %vm713, %v1144, 0.0
  %v1162 = vadd.f32 %v1160, %v1161
  %v1163 = vsel %vm713, %v1145, 0.0
  %v1164 = vadd.f32 %v1162, %v1163
  %v1165 = vsel %vm713, %v1146, 0.0
  %v1166 = vadd.f32 %v1164, %v1165
  %v1167 = vsel %vm713, %v1147, 0.0
  %v1168 = vadd.f32 %v1166, %v1167
  %v1169 = vsel %vm713, %v1148, 0.0
  %v1170 = vadd.f32 %v1168, %v1169
  %v1171 = vsel %vm713, %v1149, 0.0
  %v1172 = vadd.f32 %v1170, %v1171
  %v1173 = vsel %vm713, %v1150, 0.0
  %v1174 = vadd.f32 %v1172, %v1173
  %v1175 = vsel %vm713, %v1151, 0.0
  %v1176 = vadd.f32 %v1174, %v1175
  %v1177 = vsel %vm713, %v1152, 0.0
  %v1178 = vadd.f32 %v1176, %v1177
  %v1179 = vsel %vm713, %v1153, 0.0
  %v1180 = vadd.f32 %v1178, %v1179
  %v1181 = vsel %vm713, %v1154, 0.0
  %v1182 = vadd.f32 %v1180, %v1181
  %v1183 = vsel %vm713, %v1155, 0.0
  %v1184 = vadd.f32 %v1182, %v1183
  %v1185 = vsel %vm713, %v1156, 0.0
  %v1186 = vadd.f32 %v1184, %v1185
  %v1187 = vsel %vm713, %v1157, 0.0
  %v1188 = vadd.f32 %v1186, %v1187
  %v1189 = vrot.slane %v1188, 4
  %v1190 = vadd.f32 %v1188, %v1189
  %v1191 = vrot.slane %v1190, 2
  %v1192 = vadd.f32 %v1190, %v1191
  %v1193 = vrot.slane %v1192, 1
  %v1194 = vadd.f32 %v1192, %v1193
  %1196 = vrot.lane.b32.xlu0 %v1194, 8
  %v1197 = vpop.permute.xlu0 %1196
  %v1199 = vsel %vm713, %v1194, %v1197
  %v1201 = vrot.slane %v1199, 6
  %vm1203 = vcmask 1040384
  %v1204 = vsel %vm1203, %v1024, %v1077
  %vm1205 = vcmask 1041408
  %v1206 = vsel %vm1205, %v1204, %v1201
  %vm1207 = vcmask 124928
  %1208 = vst.msk [vmem:[%s6] sm:$0x7] %vm1207, %v1206
  // Predicated region
  $region22: #{down_forward.3} parent=0 // pred_check
    _
  $region23: #{down_forward.3} parent=0 // pred_check_branch
    %1210 = sbr.rel (0) target = $region25
  $region24: #{down_forward.3} parent=0 // pred_region
    _
  $region25: #{down_forward.3} parent=0 // pred_fallthru
    _
  // Predicated region
  $region26: #{down_forward.3} parent=0 // pred_check
    _
  $region27: #{down_forward.3} parent=0 // pred_check_branch
    %1212 = sbr.rel (0) target = $region29
  $region28: #{down_forward.3} parent=0 // pred_region
    _
  $region29: #{down_forward.3} parent=0 // pred_fallthru
    _
  // Predicated region
  $region30: #{down_forward.3} parent=0 // pred_check
    _
  $region31: #{down_forward.3} parent=0 // pred_check_branch
    %1214 = sbr.rel (0) target = $region33
  $region32: #{down_forward.3} parent=0 // pred_region
    _
  $region33: #{down_forward.3} parent=0 // pred_fallthru
    _
  // Predicated region
  $region34: #{down_forward.3} parent=0 // pred_check
    _
  $region35: #{down_forward.3} parent=0 // pred_check_branch
    %1216 = sbr.rel (0) target = $region37
  $region36: #{down_forward.3} parent=0 // pred_region
    _
  $region37: #{down_forward.3} parent=0 // pred_fallthru
    _

// kernel: down_forward.4
$region0: #{down_forward.4}
  #allocation0 [shape = 'u32[]', space=smem, size = 0x4, offset = 0x4, fixed_abs, tag = 'smem constant byte address 0x4 - core index']
  #allocation1 [shape = 'u32[72,128]{1,0:T(1,128)}', space=vmem, size = 0x9000, scoped, tag = 'internal scratch']
  %s0 = inlined_call_operand.vmem [shape: f32[16,16], index: 0, kind: input, shape index: {}]
  %s1 = inlined_call_operand.vmem [shape: f32[1,16], index: 1, kind: input, shape index: {}]
  %s2 = inlined_call_operand.vmem [shape: f32[2,8,8,16], index: 2, kind: input, shape index: {}]
  %s3 = inlined_call_operand.vmem [shape: f32[144,16], index: 3, kind: input, shape index: {}]
  %s4 = inlined_call_operand.vmem [shape: f32[2,8,8,16], index: 4, kind: output, shape index: {0}]
  %s5 = inlined_call_operand.vmem [shape: f32[1,3,16], index: 5, kind: output, shape index: {1}]
  %6 = xla_tuple %s4, %s5
  %s7 = sld [smem:[#allocation0]]
  $region34: #{down_forward.4} parent=0
    _
  %s9 = ssub.s32 1, %s7
  %s10 = scalar_select 0, %s9, %s7
  // Predicated region
  $region2: #{down_forward.4} parent=0 // pred_check
    _
  $region3: #{down_forward.4} parent=0 // pred_check_branch
    %12 = sbr.rel (0) target = $region5
  $region4: #{down_forward.4} parent=0 // pred_region
    _
  $region5: #{down_forward.4} parent=0 // pred_fallthru
    _
  // Predicated region
  $region6: #{down_forward.4} parent=0 // pred_check
    _
  $region7: #{down_forward.4} parent=0 // pred_check_branch
    %14 = sbr.rel (0) target = $region9
  $region8: #{down_forward.4} parent=0 // pred_region
    _
  $region9: #{down_forward.4} parent=0 // pred_fallthru
    _
  // Predicated region
  $region10: #{down_forward.4} parent=0 // pred_check
    _
  $region11: #{down_forward.4} parent=0 // pred_check_branch
    %16 = sbr.rel (0) target = $region13
  $region12: #{down_forward.4} parent=0 // pred_region
    _
  $region13: #{down_forward.4} parent=0 // pred_fallthru
    _
  // Predicated region
  $region14: #{down_forward.4} parent=0 // pred_check
    _
  $region15: #{down_forward.4} parent=0 // pred_check_branch
    %18 = sbr.rel (0) target = $region17
  $region16: #{down_forward.4} parent=0 // pred_region
    _
  $region17: #{down_forward.4} parent=0 // pred_fallthru
    _
  %v19 = vld [vmem:[%s2] sm:$0xff]
  %v20 = vld [vmem:[%s2 + $0x8] sm:$0xff]
  %v21 = vld [vmem:[%s2 + $0x10] sm:$0xff]
  %v22 = vld [vmem:[%s2 + $0x18] sm:$0xff]
  %v23 = vld [vmem:[%s2 + $0x20] sm:$0xff]
  %v24 = vld [vmem:[%s2 + $0x28] sm:$0xff]
  %v25 = vld [vmem:[%s2 + $0x30] sm:$0xff]
  %v26 = vld [vmem:[%s2 + $0x38] sm:$0xff]
  %v27 = vld [vmem:[%s2 + $0x40] sm:$0xff]
  %v28 = vld [vmem:[%s2 + $0x48] sm:$0xff]
  %v29 = vld [vmem:[%s2 + $0x50] sm:$0xff]
  %v30 = vld [vmem:[%s2 + $0x58] sm:$0xff]
  %v31 = vld [vmem:[%s2 + $0x60] sm:$0xff]
  %v32 = vld [vmem:[%s2 + $0x68] sm:$0xff]
  %v33 = vld [vmem:[%s2 + $0x70] sm:$0xff]
  %v34 = vld [vmem:[%s2 + $0x78] sm:$0xff]
  %v35 = vld [vmem:[%s0] sm:$0xff]
  %v36 = vld [vmem:[%s0 + $0x8] sm:$0xff]
  %v37 = vld [vmem:[%s1] sm:$0x1]
  %v39 = vperm.slane %v37, 0
  %vm41 = vcmask 130048
  %v43 = vsel %vm41, %v19, 0
  %v46 = vsel %vm41, %v20, 0
  %v49 = vsel %vm41, %v21, 0
  %v52 = vsel %vm41, %v22, 0
  %v55 = vsel %vm41, %v23, 0
  %v58 = vsel %vm41, %v24, 0
  %v61 = vsel %vm41, %v25, 0
  %v64 = vsel %vm41, %v26, 0
  %v67 = vsel %vm41, %v27, 0
  %v70 = vsel %vm41, %v28, 0
  %v73 = vsel %vm41, %v29, 0
  %v76 = vsel %vm41, %v30, 0
  %v79 = vsel %vm41, %v31, 0
  %v82 = vsel %vm41, %v32, 0
  %v85 = vsel %vm41, %v33, 0
  %v88 = vsel %vm41, %v34, 0
  %90 = vmatpush.msra.mxu0 0.0
  %91 = vmatpush.msra.mxu0 0.0
  %92 = vmatpush.msra.mxu0 0.0
  %93 = vmatpush.msra.mxu0 0.0
  %94 = vmatpush.msra.mxu0 0.0
  %95 = vmatpush.msra.mxu0 0.0
  %96 = vmatpush.msra.mxu0 0.0
  %97 = vmatpush.msra.mxu0 0.0
  %98 = vmatpush.msra.mxu0 0.0
  %99 = vmatpush.msra.mxu0 0.0
  %100 = vmatpush.msra.mxu0 0.0
  %101 = vmatpush.msra.mxu0 0.0
  %102 = vmatpush.msra.mxu0 0.0
  %103 = vmatpush.msra.mxu0 0.0
  %104 = vmatpush.msra.mxu0 %v36
  %105 = vmatpush.msra.mxu0 %v35
  %106 = vmatmul.f32.gmra.mxu0 %v43
  %v107 = vpop.f32.mrf.mxu0
  %v108 = vadd.f32 %v39, %v107
  %109 = vmatmul.f32.gmra.mxu0 %v46
  %v110 = vpop.f32.mrf.mxu0
  %v111 = vadd.f32 %v39, %v110
  %112 = vmatmul.f32.gmra.mxu0 %v49
  %v113 = vpop.f32.mrf.mxu0
  %v114 = vadd.f32 %v39, %v113
  %115 = vmatmul.f32.gmra.mxu0 %v52
  %v116 = vpop.f32.mrf.mxu0
  %v117 = vadd.f32 %v39, %v116
  %118 = vmatmul.f32.gmra.mxu0 %v55
  %v119 = vpop.f32.mrf.mxu0
  %v120 = vadd.f32 %v39, %v119
  %121 = vmatmul.f32.gmra.mxu0 %v58
  %v122 = vpop.f32.mrf.mxu0
  %v123 = vadd.f32 %v39, %v122
  %124 = vmatmul.f32.gmra.mxu0 %v61
  %v125 = vpop.f32.mrf.mxu0
  %v126 = vadd.f32 %v39, %v125
  %127 = vmatmul.f32.gmra.mxu0 %v64
  %v128 = vpop.f32.mrf.mxu0
  %v129 = vadd.f32 %v39, %v128
  %130 = vmatmul.f32.gmra.mxu0 %v67
  %v131 = vpop.f32.mrf.mxu0
  %v132 = vadd.f32 %v39, %v131
  %133 = vmatmul.f32.gmra.mxu0 %v70
  %v134 = vpop.f32.mrf.mxu0
  %v135 = vadd.f32 %v39, %v134
  %136 = vmatmul.f32.gmra.mxu0 %v73
  %v137 = vpop.f32.mrf.mxu0
  %v138 = vadd.f32 %v39, %v137
  %139 = vmatmul.f32.gmra.mxu0 %v76
  %v140 = vpop.f32.mrf.mxu0
  %v141 = vadd.f32 %v39, %v140
  %142 = vmatmul.f32.gmra.mxu0 %v79
  %v143 = vpop.f32.mrf.mxu0
  %v144 = vadd.f32 %v39, %v143
  %145 = vmatmul.f32.gmra.mxu0 %v82
  %v146 = vpop.f32.mrf.mxu0
  %v147 = vadd.f32 %v39, %v146
  %148 = vmatmul.f32.gmra.mxu0 %v85
  %v149 = vpop.f32.mrf.mxu0
  %v150 = vadd.f32 %v39, %v149
  %151 = vmatmul.f32.gmra.mxu0 %v88
  %v152 = vpop.f32.mrf.mxu0
  %v153 = vadd.f32 %v39, %v152
  %154 = vdwg.mxu0
  %v155 = vmax.f32 %v108, 0.0
  %v156 = vmax.f32 %v111, 0.0
  %v157 = vmax.f32 %v114, 0.0
  %v158 = vmax.f32 %v117, 0.0
  %v159 = vmax.f32 %v120, 0.0
  %v160 = vmax.f32 %v123, 0.0
  %v161 = vmax.f32 %v126, 0.0
  %v162 = vmax.f32 %v129, 0.0
  %v163 = vmax.f32 %v132, 0.0
  %v164 = vmax.f32 %v135, 0.0
  %v165 = vmax.f32 %v138, 0.0
  %v166 = vmax.f32 %v141, 0.0
  %v167 = vmax.f32 %v144, 0.0
  %v168 = vmax.f32 %v147, 0.0
  %v169 = vmax.f32 %v150, 0.0
  %v170 = vmax.f32 %v153, 0.0
  %v187 = vrot.slane %v155, 7
  %v188 = vrot.slane %v156, 7
  %v189 = vrot.slane %v157, 7
  %v190 = vrot.slane %v158, 7
  %v191 = vrot.slane %v159, 7
  %v192 = vrot.slane %v160, 7
  %v193 = vrot.slane %v161, 7
  %v194 = vrot.slane %v162, 7
  %v195 = vrot.slane %v163, 7
  %v196 = vrot.slane %v164, 7
  %v197 = vrot.slane %v165, 7
  %v198 = vrot.slane %v166, 7
  %v199 = vrot.slane %v167, 7
  %v200 = vrot.slane %v168, 7
  %v201 = vrot.slane %v169, 7
  %v202 = vrot.slane %v170, 7
  %v219 = vrot.slane %v155, 6
  %v220 = vrot.slane %v156, 6
  %v221 = vrot.slane %v157, 6
  %v222 = vrot.slane %v158, 6
  %v223 = vrot.slane %v159, 6
  %v224 = vrot.slane %v160, 6
  %v225 = vrot.slane %v161, 6
  %v226 = vrot.slane %v162, 6
  %v227 = vrot.slane %v163, 6
  %v228 = vrot.slane %v164, 6
  %v229 = vrot.slane %v165, 6
  %v230 = vrot.slane %v166, 6
  %v231 = vrot.slane %v167, 6
  %v232 = vrot.slane %v168, 6
  %v233 = vrot.slane %v169, 6
  %v234 = vrot.slane %v170, 6
  %vm251 = vcmask 1040384
  %v252 = vsel %vm251, %v155, %v187
  %v253 = vsel %vm251, %v156, %v188
  %v254 = vsel %vm251, %v157, %v189
  %v255 = vsel %vm251, %v158, %v190
  %v256 = vsel %vm251, %v159, %v191
  %v257 = vsel %vm251, %v160, %v192
  %v258 = vsel %vm251, %v161, %v193
  %v259 = vsel %vm251, %v162, %v194
  %v260 = vsel %vm251, %v163, %v195
  %v261 = vsel %vm251, %v164, %v196
  %v262 = vsel %vm251, %v165, %v197
  %v263 = vsel %vm251, %v166, %v198
  %v264 = vsel %vm251, %v167, %v199
  %v265 = vsel %vm251, %v168, %v200
  %v266 = vsel %vm251, %v169, %v201
  %v267 = vsel %vm251, %v170, %v202
  %v268 = vsel %vm251, %v187, %v219
  %v269 = vsel %vm251, %v188, %v220
  %v270 = vsel %vm251, %v189, %v221
  %v271 = vsel %vm251, %v190, %v222
  %v272 = vsel %vm251, %v191, %v223
  %v273 = vsel %vm251, %v192, %v224
  %v274 = vsel %vm251, %v193, %v225
  %v275 = vsel %vm251, %v194, %v226
  %v276 = vsel %vm251, %v195, %v227
  %v277 = vsel %vm251, %v196, %v228
  %v278 = vsel %vm251, %v197, %v229
  %v279 = vsel %vm251, %v198, %v230
  %v280 = vsel %vm251, %v199, %v231
  %v281 = vsel %vm251, %v200, %v232
  %v282 = vsel %vm251, %v201, %v233
  %v283 = vsel %vm251, %v202, %v234
  %vm312 = vcmask 1046528
  %v313 = vrot.slane %v252, 1
  %v314 = vrot.slane %v268, 1
  %v315 = vsel %vm312, %v313, %v314
  %v316 = vrot.slane %v253, 1
  %v317 = vrot.slane %v269, 1
  %v318 = vsel %vm312, %v316, %v317
  %v319 = vrot.slane %v254, 1
  %v320 = vrot.slane %v270, 1
  %v321 = vsel %vm312, %v319, %v320
  %v322 = vrot.slane %v255, 1
  %v323 = vrot.slane %v271, 1
  %v324 = vsel %vm312, %v322, %v323
  %v325 = vrot.slane %v256, 1
  %v326 = vrot.slane %v272, 1
  %v327 = vsel %vm312, %v325, %v326
  %v328 = vrot.slane %v257, 1
  %v329 = vrot.slane %v273, 1
  %v330 = vsel %vm312, %v328, %v329
  %v331 = vrot.slane %v258, 1
  %v332 = vrot.slane %v274, 1
  %v333 = vsel %vm312, %v331, %v332
  %v334 = vrot.slane %v260, 1
  %v335 = vrot.slane %v276, 1
  %v336 = vsel %vm312, %v334, %v335
  %v337 = vrot.slane %v261, 1
  %v338 = vrot.slane %v277, 1
  %v339 = vsel %vm312, %v337, %v338
  %v340 = vrot.slane %v262, 1
  %v341 = vrot.slane %v278, 1
  %v342 = vsel %vm312, %v340, %v341
  %v343 = vrot.slane %v263, 1
  %v344 = vrot.slane %v279, 1
  %v345 = vsel %vm312, %v343, %v344
  %v346 = vrot.slane %v264, 1
  %v347 = vrot.slane %v280, 1
  %v348 = vsel %vm312, %v346, %v347
  %v349 = vrot.slane %v265, 1
  %v350 = vrot.slane %v281, 1
  %v351 = vsel %vm312, %v349, %v350
  %v352 = vrot.slane %v266, 1
  %v353 = vrot.slane %v282, 1
  %v354 = vsel %vm312, %v352, %v353
  %vm355 = vcmask 1045504
  %v356 = vrot.slane %v252, 2
  %v357 = vrot.slane %v268, 2
  %v358 = vsel %vm355, %v356, %v357
  %v359 = vrot.slane %v253, 2
  %v360 = vrot.slane %v269, 2
  %v361 = vsel %vm355, %v359, %v360
  %v362 = vrot.slane %v254, 2
  %v363 = vrot.slane %v270, 2
  %v364 = vsel %vm355, %v362, %v363
  %v365 = vrot.slane %v255, 2
  %v366 = vrot.slane %v271, 2
  %v367 = vsel %vm355, %v365, %v366
  %v368 = vrot.slane %v256, 2
  %v369 = vrot.slane %v272, 2
  %v370 = vsel %vm355, %v368, %v369
  %v371 = vrot.slane %v257, 2
  %v372 = vrot.slane %v273, 2
  %v373 = vsel %vm355, %v371, %v372
  %v374 = vrot.slane %v258, 2
  %v375 = vrot.slane %v274, 2
  %v376 = vsel %vm355, %v374, %v375
  %v377 = vrot.slane %v260, 2
  %v378 = vrot.slane %v276, 2
  %v379 = vsel %vm355, %v377, %v378
  %v380 = vrot.slane %v261, 2
  %v381 = vrot.slane %v277, 2
  %v382 = vsel %vm355, %v380, %v381
  %v383 = vrot.slane %v262, 2
  %v384 = vrot.slane %v278, 2
  %v385 = vsel %vm355, %v383, %v384
  %v386 = vrot.slane %v263, 2
  %v387 = vrot.slane %v279, 2
  %v388 = vsel %vm355, %v386, %v387
  %v389 = vrot.slane %v264, 2
  %v390 = vrot.slane %v280, 2
  %v391 = vsel %vm355, %v389, %v390
  %v392 = vrot.slane %v265, 2
  %v393 = vrot.slane %v281, 2
  %v394 = vsel %vm355, %v392, %v393
  %v395 = vrot.slane %v266, 2
  %v396 = vrot.slane %v282, 2
  %v397 = vsel %vm355, %v395, %v396
  %v402 = vrot.slane %v259, 1
  %v403 = vrot.slane %v275, 1
  %v404 = vsel %vm312, %v402, %v403
  %v405 = vrot.slane %v267, 1
  %v406 = vrot.slane %v283, 1
  %v407 = vsel %vm312, %v405, %v406
  %v408 = vrot.slane %v259, 2
  %v409 = vrot.slane %v275, 2
  %v410 = vsel %vm355, %v408, %v409
  %v411 = vrot.slane %v267, 2
  %v412 = vrot.slane %v283, 2
  %v413 = vsel %vm355, %v411, %v412
  %414 = vrot.lane.b32.xlu0 %v315, 16
  %v415 = vpop.permute.xlu0 %414
  %416 = vrot.lane.b32.xlu0 %v318, 16
  %v417 = vpop.permute.xlu0 %416
  %418 = vrot.lane.b32.xlu0 %v321, 16
  %v419 = vpop.permute.xlu0 %418
  %420 = vrot.lane.b32.xlu0 %v324, 16
  %v421 = vpop.permute.xlu0 %420
  %422 = vrot.lane.b32.xlu0 %v327, 16
  %v423 = vpop.permute.xlu0 %422
  %424 = vrot.lane.b32.xlu0 %v330, 16
  %v425 = vpop.permute.xlu0 %424
  %426 = vrot.lane.b32.xlu0 %v333, 16
  %v427 = vpop.permute.xlu0 %426
  %428 = vrot.lane.b32.xlu0 %v336, 16
  %v429 = vpop.permute.xlu0 %428
  %430 = vrot.lane.b32.xlu0 %v339, 16
  %v431 = vpop.permute.xlu0 %430
  %432 = vrot.lane.b32.xlu0 %v342, 16
  %v433 = vpop.permute.xlu0 %432
  %434 = vrot.lane.b32.xlu0 %v345, 16
  %v435 = vpop.permute.xlu0 %434
  %436 = vrot.lane.b32.xlu0 %v348, 16
  %v437 = vpop.permute.xlu0 %436
  %438 = vrot.lane.b32.xlu0 %v351, 16
  %v439 = vpop.permute.xlu0 %438
  %440 = vrot.lane.b32.xlu0 %v354, 16
  %v441 = vpop.permute.xlu0 %440
  %456 = vrot.lane.b32.xlu0 %v358, 32
  %v457 = vpop.permute.xlu0 %456
  %458 = vrot.lane.b32.xlu0 %v361, 32
  %v459 = vpop.permute.xlu0 %458
  %460 = vrot.lane.b32.xlu0 %v364, 32
  %v461 = vpop.permute.xlu0 %460
  %462 = vrot.lane.b32.xlu0 %v367, 32
  %v463 = vpop.permute.xlu0 %462
  %464 = vrot.lane.b32.xlu0 %v370, 32
  %v465 = vpop.permute.xlu0 %464
  %466 = vrot.lane.b32.xlu0 %v373, 32
  %v467 = vpop.permute.xlu0 %466
  %468 = vrot.lane.b32.xlu0 %v376, 32
  %v469 = vpop.permute.xlu0 %468
  %470 = vrot.lane.b32.xlu0 %v379, 32
  %v471 = vpop.permute.xlu0 %470
  %472 = vrot.lane.b32.xlu0 %v382, 32
  %v473 = vpop.permute.xlu0 %472
  %474 = vrot.lane.b32.xlu0 %v385, 32
  %v475 = vpop.permute.xlu0 %474
  %476 = vrot.lane.b32.xlu0 %v388, 32
  %v477 = vpop.permute.xlu0 %476
  %478 = vrot.lane.b32.xlu0 %v391, 32
  %v479 = vpop.permute.xlu0 %478
  %480 = vrot.lane.b32.xlu0 %v394, 32
  %v481 = vpop.permute.xlu0 %480
  %482 = vrot.lane.b32.xlu0 %v397, 32
  %v483 = vpop.permute.xlu0 %482
  %498 = vrot.lane.b32.xlu0 %v252, 48
  %v499 = vpop.permute.xlu0 %498
  %500 = vrot.lane.b32.xlu0 %v253, 48
  %v501 = vpop.permute.xlu0 %500
  %502 = vrot.lane.b32.xlu0 %v254, 48
  %v503 = vpop.permute.xlu0 %502
  %504 = vrot.lane.b32.xlu0 %v255, 48
  %v505 = vpop.permute.xlu0 %504
  %506 = vrot.lane.b32.xlu0 %v256, 48
  %v507 = vpop.permute.xlu0 %506
  %508 = vrot.lane.b32.xlu0 %v257, 48
  %v509 = vpop.permute.xlu0 %508
  %510 = vrot.lane.b32.xlu0 %v258, 48
  %v511 = vpop.permute.xlu0 %510
  %512 = vrot.lane.b32.xlu0 %v259, 48
  %v513 = vpop.permute.xlu0 %512
  %514 = vrot.lane.b32.xlu0 %v260, 48
  %v515 = vpop.permute.xlu0 %514
  %516 = vrot.lane.b32.xlu0 %v261, 48
  %v517 = vpop.permute.xlu0 %516
  %518 = vrot.lane.b32.xlu0 %v262, 48
  %v519 = vpop.permute.xlu0 %518
  %520 = vrot.lane.b32.xlu0 %v263, 48
  %v521 = vpop.permute.xlu0 %520
  %522 = vrot.lane.b32.xlu0 %v264, 48
  %v523 = vpop.permute.xlu0 %522
  %524 = vrot.lane.b32.xlu0 %v265, 48
  %v525 = vpop.permute.xlu0 %524
  %526 = vrot.lane.b32.xlu0 %v266, 48
  %v527 = vpop.permute.xlu0 %526
  %528 = vrot.lane.b32.xlu0 %v267, 48
  %v529 = vpop.permute.xlu0 %528
  %546 = vrot.lane.b32.xlu0 %v315, 64
  %v547 = vpop.permute.xlu0 %546
  %548 = vrot.lane.b32.xlu0 %v318, 64
  %v549 = vpop.permute.xlu0 %548
  %550 = vrot.lane.b32.xlu0 %v321, 64
  %v551 = vpop.permute.xlu0 %550
  %552 = vrot.lane.b32.xlu0 %v324, 64
  %v553 = vpop.permute.xlu0 %552
  %554 = vrot.lane.b32.xlu0 %v327, 64
  %v555 = vpop.permute.xlu0 %554
  %556 = vrot.lane.b32.xlu0 %v330, 64
  %v557 = vpop.permute.xlu0 %556
  %558 = vrot.lane.b32.xlu0 %v333, 64
  %v559 = vpop.permute.xlu0 %558
  %560 = vrot.lane.b32.xlu0 %v404, 64
  %v561 = vpop.permute.xlu0 %560
  %562 = vrot.lane.b32.xlu0 %v336, 64
  %v563 = vpop.permute.xlu0 %562
  %564 = vrot.lane.b32.xlu0 %v339, 64
  %v565 = vpop.permute.xlu0 %564
  %566 = vrot.lane.b32.xlu0 %v342, 64
  %v567 = vpop.permute.xlu0 %566
  %568 = vrot.lane.b32.xlu0 %v345, 64
  %v569 = vpop.permute.xlu0 %568
  %570 = vrot.lane.b32.xlu0 %v348, 64
  %v571 = vpop.permute.xlu0 %570
  %572 = vrot.lane.b32.xlu0 %v351, 64
  %v573 = vpop.permute.xlu0 %572
  %574 = vrot.lane.b32.xlu0 %v354, 64
  %v575 = vpop.permute.xlu0 %574
  %576 = vrot.lane.b32.xlu0 %v407, 64
  %v577 = vpop.permute.xlu0 %576
  %594 = vrot.lane.b32.xlu0 %v358, 80
  %v595 = vpop.permute.xlu0 %594
  %596 = vrot.lane.b32.xlu0 %v361, 80
  %v597 = vpop.permute.xlu0 %596
  %598 = vrot.lane.b32.xlu0 %v364, 80
  %v599 = vpop.permute.xlu0 %598
  %600 = vrot.lane.b32.xlu0 %v367, 80
  %v601 = vpop.permute.xlu0 %600
  %602 = vrot.lane.b32.xlu0 %v370, 80
  %v603 = vpop.permute.xlu0 %602
  %604 = vrot.lane.b32.xlu0 %v373, 80
  %v605 = vpop.permute.xlu0 %604
  %606 = vrot.lane.b32.xlu0 %v376, 80
  %v607 = vpop.permute.xlu0 %606
  %608 = vrot.lane.b32.xlu0 %v410, 80
  %v609 = vpop.permute.xlu0 %608
  %610 = vrot.lane.b32.xlu0 %v379, 80
  %v611 = vpop.permute.xlu0 %610
  %612 = vrot.lane.b32.xlu0 %v382, 80
  %v613 = vpop.permute.xlu0 %612
  %614 = vrot.lane.b32.xlu0 %v385, 80
  %v615 = vpop.permute.xlu0 %614
  %616 = vrot.lane.b32.xlu0 %v388, 80
  %v617 = vpop.permute.xlu0 %616
  %618 = vrot.lane.b32.xlu0 %v391, 80
  %v619 = vpop.permute.xlu0 %618
  %620 = vrot.lane.b32.xlu0 %v394, 80
  %v621 = vpop.permute.xlu0 %620
  %622 = vrot.lane.b32.xlu0 %v397, 80
  %v623 = vpop.permute.xlu0 %622
  %624 = vrot.lane.b32.xlu0 %v413, 80
  %v625 = vpop.permute.xlu0 %624
  %642 = vrot.lane.b32.xlu0 %v253, 96
  %v643 = vpop.permute.xlu0 %642
  %644 = vrot.lane.b32.xlu0 %v254, 96
  %v645 = vpop.permute.xlu0 %644
  %646 = vrot.lane.b32.xlu0 %v255, 96
  %v647 = vpop.permute.xlu0 %646
  %648 = vrot.lane.b32.xlu0 %v256, 96
  %v649 = vpop.permute.xlu0 %648
  %650 = vrot.lane.b32.xlu0 %v257, 96
  %v651 = vpop.permute.xlu0 %650
  %652 = vrot.lane.b32.xlu0 %v258, 96
  %v653 = vpop.permute.xlu0 %652
  %654 = vrot.lane.b32.xlu0 %v259, 96
  %v655 = vpop.permute.xlu0 %654
  %656 = vrot.lane.b32.xlu0 %v261, 96
  %v657 = vpop.permute.xlu0 %656
  %658 = vrot.lane.b32.xlu0 %v262, 96
  %v659 = vpop.permute.xlu0 %658
  %660 = vrot.lane.b32.xlu0 %v263, 96
  %v661 = vpop.permute.xlu0 %660
  %662 = vrot.lane.b32.xlu0 %v264, 96
  %v663 = vpop.permute.xlu0 %662
  %664 = vrot.lane.b32.xlu0 %v265, 96
  %v665 = vpop.permute.xlu0 %664
  %666 = vrot.lane.b32.xlu0 %v266, 96
  %v667 = vpop.permute.xlu0 %666
  %668 = vrot.lane.b32.xlu0 %v267, 96
  %v669 = vpop.permute.xlu0 %668
  %684 = vrot.lane.b32.xlu0 %v318, 112
  %v685 = vpop.permute.xlu0 %684
  %686 = vrot.lane.b32.xlu0 %v321, 112
  %v687 = vpop.permute.xlu0 %686
  %688 = vrot.lane.b32.xlu0 %v324, 112
  %v689 = vpop.permute.xlu0 %688
  %690 = vrot.lane.b32.xlu0 %v327, 112
  %v691 = vpop.permute.xlu0 %690
  %692 = vrot.lane.b32.xlu0 %v330, 112
  %v693 = vpop.permute.xlu0 %692
  %694 = vrot.lane.b32.xlu0 %v333, 112
  %v695 = vpop.permute.xlu0 %694
  %696 = vrot.lane.b32.xlu0 %v404, 112
  %v697 = vpop.permute.xlu0 %696
  %698 = vrot.lane.b32.xlu0 %v339, 112
  %v699 = vpop.permute.xlu0 %698
  %700 = vrot.lane.b32.xlu0 %v342, 112
  %v701 = vpop.permute.xlu0 %700
  %702 = vrot.lane.b32.xlu0 %v345, 112
  %v703 = vpop.permute.xlu0 %702
  %704 = vrot.lane.b32.xlu0 %v348, 112
  %v705 = vpop.permute.xlu0 %704
  %706 = vrot.lane.b32.xlu0 %v351, 112
  %v707 = vpop.permute.xlu0 %706
  %708 = vrot.lane.b32.xlu0 %v354, 112
  %v709 = vpop.permute.xlu0 %708
  %710 = vrot.lane.b32.xlu0 %v407, 112
  %v711 = vpop.permute.xlu0 %710
  %v726 = vsel %vm41, %v252, %v415
  %v727 = vsel %vm41, %v253, %v417
  %v728 = vsel %vm41, %v254, %v419
  %v729 = vsel %vm41, %v255, %v421
  %v730 = vsel %vm41, %v256, %v423
  %v731 = vsel %vm41, %v257, %v425
  %v732 = vsel %vm41, %v258, %v427
  %v733 = vsel %vm41, %v260, %v429
  %v734 = vsel %vm41, %v261, %v431
  %v735 = vsel %vm41, %v262, %v433
  %v736 = vsel %vm41, %v263, %v435
  %v737 = vsel %vm41, %v264, %v437
  %v738 = vsel %vm41, %v265, %v439
  %v739 = vsel %vm41, %v266, %v441
  %vm740 = vcmask 261120
  %v741 = vsel %vm740, %v726, %v457
  %v742 = vsel %vm740, %v727, %v459
  %v743 = vsel %vm740, %v728, %v461
  %v744 = vsel %vm740, %v729, %v463
  %v745 = vsel %vm740, %v730, %v465
  %v746 = vsel %vm740, %v731, %v467
  %v747 = vsel %vm740, %v732, %v469
  %v748 = vsel %vm740, %v733, %v471
  %v749 = vsel %vm740, %v734, %v473
  %v750 = vsel %vm740, %v735, %v475
  %v751 = vsel %vm740, %v736, %v477
  %v752 = vsel %vm740, %v737, %v479
  %v753 = vsel %vm740, %v738, %v481
  %v754 = vsel %vm740, %v739, %v483
  %vm755 = vcmask 392192
  %v756 = vsel %vm755, %v741, %v499
  %v757 = vsel %vm755, %v741, %v501
  %v758 = vsel %vm755, %v742, %v503
  %v759 = vsel %vm755, %v743, %v505
  %v760 = vsel %vm755, %v744, %v507
  %v761 = vsel %vm755, %v745, %v509
  %v762 = vsel %vm755, %v746, %v511
  %v763 = vsel %vm755, %v747, %v513
  %v764 = vsel %vm755, %v748, %v515
  %v765 = vsel %vm755, %v748, %v517
  %v766 = vsel %vm755, %v749, %v519
  %v767 = vsel %vm755, %v750, %v521
  %v768 = vsel %vm755, %v751, %v523
  %v769 = vsel %vm755, %v752, %v525
  %v770 = vsel %vm755, %v753, %v527
  %v771 = vsel %vm755, %v754, %v529
  %vm772 = vcmask 523264
  %v773 = vsel %vm772, %v756, %v547
  %v774 = vsel %vm772, %v757, %v549
  %v775 = vsel %vm772, %v758, %v551
  %v776 = vsel %vm772, %v759, %v553
  %v777 = vsel %vm772, %v760, %v555
  %v778 = vsel %vm772, %v761, %v557
  %v779 = vsel %vm772, %v762, %v559
  %v780 = vsel %vm772, %v763, %v561
  %v781 = vsel %vm772, %v764, %v563
  %v782 = vsel %vm772, %v765, %v565
  %v783 = vsel %vm772, %v766, %v567
  %v784 = vsel %vm772, %v767, %v569
  %v785 = vsel %vm772, %v768, %v571
  %v786 = vsel %vm772, %v769, %v573
  %v787 = vsel %vm772, %v770, %v575
  %v788 = vsel %vm772, %v771, %v577
  %vm789 = vcmask 654336
  %v790 = vsel %vm789, %v773, %v595
  %v791 = vsel %vm789, %v774, %v597
  %v792 = vsel %vm789, %v775, %v599
  %v793 = vsel %vm789, %v776, %v601
  %v794 = vsel %vm789, %v777, %v603
  %v795 = vsel %vm789, %v778, %v605
  %v796 = vsel %vm789, %v779, %v607
  %v797 = vsel %vm789, %v780, %v609
  %v798 = vsel %vm789, %v781, %v611
  %v799 = vsel %vm789, %v782, %v613
  %v800 = vsel %vm789, %v783, %v615
  %v801 = vsel %vm789, %v784, %v617
  %v802 = vsel %vm789, %v785, %v619
  %v803 = vsel %vm789, %v786, %v621
  %v804 = vsel %vm789, %v787, %v623
  %v805 = vsel %vm789, %v788, %v625
  %vm806 = vcmask 785408
  %v807 = vsel %vm806, %v790, %v643
  %v808 = vsel %vm806, %v791, %v645
  %v809 = vsel %vm806, %v792, %v647
  %v810 = vsel %vm806, %v793, %v649
  %v811 = vsel %vm806, %v794, %v651
  %v812 = vsel %vm806, %v795, %v653
  %v813 = vsel %vm806, %v796, %v655
  %v814 = vsel %vm806, %v797, %v655
  %v815 = vsel %vm806, %v798, %v657
  %v816 = vsel %vm806, %v799, %v659
  %v817 = vsel %vm806, %v800, %v661
  %v818 = vsel %vm806, %v801, %v663
  %v819 = vsel %vm806, %v802, %v665
  %v820 = vsel %vm806, %v803, %v667
  %v821 = vsel %vm806, %v804, %v669
  %v822 = vsel %vm806, %v805, %v669
  %vm823 = vcmask 916480
  %v824 = vsel %vm823, %v807, %v685
  %v825 = vsel %vm823, %v808, %v687
  %v826 = vsel %vm823, %v809, %v689
  %v827 = vsel %vm823, %v810, %v691
  %v828 = vsel %vm823, %v811, %v693
  %v829 = vsel %vm823, %v812, %v695
  %v830 = vsel %vm823, %v813, %v697
  %v831 = vsel %vm823, %v814, %v697
  %v832 = vsel %vm823, %v815, %v699
  %v833 = vsel %vm823, %v816, %v701
  %v834 = vsel %vm823, %v817, %v703
  %v835 = vsel %vm823, %v818, %v705
  %v836 = vsel %vm823, %v819, %v707
  %v837 = vsel %vm823, %v820, %v709
  %v838 = vsel %vm823, %v821, %v711
  %v839 = vsel %vm823, %v822, %v711
  %v840 = vld [vmem:[%s3] sm:$0xff]
  %v841 = vld [vmem:[%s3 + $0x8] sm:$0xff]
  %v842 = vld [vmem:[%s3 + $0x10] sm:$0xff]
  %v843 = vld [vmem:[%s3 + $0x18] sm:$0xff]
  %v844 = vld [vmem:[%s3 + $0x20] sm:$0xff]
  %v845 = vld [vmem:[%s3 + $0x28] sm:$0xff]
  %v846 = vld [vmem:[%s3 + $0x30] sm:$0xff]
  %v847 = vld [vmem:[%s3 + $0x38] sm:$0xff]
  %v848 = vld [vmem:[%s3 + $0x40] sm:$0xff]
  %v849 = vld [vmem:[%s3 + $0x48] sm:$0xff]
  %v850 = vld [vmem:[%s3 + $0x50] sm:$0xff]
  %v851 = vld [vmem:[%s3 + $0x58] sm:$0xff]
  %v852 = vld [vmem:[%s3 + $0x60] sm:$0xff]
  %v853 = vld [vmem:[%s3 + $0x68] sm:$0xff]
  %v854 = vld [vmem:[%s3 + $0x70] sm:$0xff]
  %v855 = vld [vmem:[%s3 + $0x78] sm:$0xff]
  %v856 = vld [vmem:[%s3 + $0x80] sm:$0xff]
  %v857 = vld [vmem:[%s3 + $0x88] sm:$0xff]
  %v858 = vsel %vm41, %v361, 0
  %v860 = vsel %vm41, %v364, 0
  %v862 = vsel %vm41, %v367, 0
  %v864 = vsel %vm41, %v370, 0
  %v866 = vsel %vm41, %v373, 0
  %v868 = vsel %vm41, %v376, 0
  %v870 = vsel %vm41, %v410, 0
  %v872 = vsel %vm41, %v382, 0
  %v874 = vsel %vm41, %v385, 0
  %v876 = vsel %vm41, %v388, 0
  %v878 = vsel %vm41, %v391, 0
  %v880 = vsel %vm41, %v394, 0
  %v882 = vsel %vm41, %v397, 0
  %v884 = vsel %vm41, %v413, 0
  %886 = vmatpush.msra.mxu0 %v855
  %887 = vmatpush.msra.mxu0 %v854
  %888 = vmatpush.msra.mxu0 %v853
  %889 = vmatpush.msra.mxu0 %v852
  %890 = vmatpush.msra.mxu0 %v851
  %891 = vmatpush.msra.mxu0 %v850
  %892 = vmatpush.msra.mxu0 %v849
  %893 = vmatpush.msra.mxu0 %v848
  %894 = vmatpush.msra.mxu0 %v847
  %895 = vmatpush.msra.mxu0 %v846
  %896 = vmatpush.msra.mxu0 %v845
  %897 = vmatpush.msra.mxu0 %v844
  %898 = vmatpush.msra.mxu0 %v843
  %899 = vmatpush.msra.mxu0 %v842
  %900 = vmatpush.msra.mxu0 %v841
  %901 = vmatpush.msra.mxu0 %v840
  %902 = vmatmul.f32.gmra.mxu0 %v824
  %v903 = vpop.f32.mrf.mxu0
  %v904 = vadd.f32 0.0, %v903
  %905 = vmatmul.f32.gmra.mxu0 %v825
  %v906 = vpop.f32.mrf.mxu0
  %v907 = vadd.f32 0.0, %v906
  %908 = vmatmul.f32.gmra.mxu0 %v826
  %v909 = vpop.f32.mrf.mxu0
  %v910 = vadd.f32 0.0, %v909
  %911 = vmatmul.f32.gmra.mxu0 %v827
  %v912 = vpop.f32.mrf.mxu0
  %v913 = vadd.f32 0.0, %v912
  %914 = vmatmul.f32.gmra.mxu0 %v828
  %v915 = vpop.f32.mrf.mxu0
  %v916 = vadd.f32 0.0, %v915
  %917 = vmatmul.f32.gmra.mxu0 %v829
  %v918 = vpop.f32.mrf.mxu0
  %v919 = vadd.f32 0.0, %v918
  %920 = vmatmul.f32.gmra.mxu0 %v830
  %v921 = vpop.f32.mrf.mxu0
  %v922 = vadd.f32 0.0, %v921
  %923 = vmatmul.f32.gmra.mxu0 %v831
  %v924 = vpop.f32.mrf.mxu0
  %v925 = vadd.f32 0.0, %v924
  %926 = vmatmul.f32.gmra.mxu0 %v832
  %v927 = vpop.f32.mrf.mxu0
  %v928 = vadd.f32 0.0, %v927
  %929 = vmatmul.f32.gmra.mxu0 %v833
  %v930 = vpop.f32.mrf.mxu0
  %v931 = vadd.f32 0.0, %v930
  %932 = vmatmul.f32.gmra.mxu0 %v834
  %v933 = vpop.f32.mrf.mxu0
  %v934 = vadd.f32 0.0, %v933
  %935 = vmatmul.f32.gmra.mxu0 %v835
  %v936 = vpop.f32.mrf.mxu0
  %v937 = vadd.f32 0.0, %v936
  %938 = vmatmul.f32.gmra.mxu0 %v836
  %v939 = vpop.f32.mrf.mxu0
  %v940 = vadd.f32 0.0, %v939
  %941 = vmatmul.f32.gmra.mxu0 %v837
  %v942 = vpop.f32.mrf.mxu0
  %v943 = vadd.f32 0.0, %v942
  %944 = vmatmul.f32.gmra.mxu0 %v838
  %v945 = vpop.f32.mrf.mxu0
  %v946 = vadd.f32 0.0, %v945
  %947 = vmatmul.f32.gmra.mxu0 %v839
  %v948 = vpop.f32.mrf.mxu0
  %v949 = vadd.f32 0.0, %v948
  %950 = vdwg.mxu0
  %951 = vmatpush.msra.mxu0 0.0
  %952 = vmatpush.msra.mxu0 0.0
  %953 = vmatpush.msra.mxu0 0.0
  %954 = vmatpush.msra.mxu0 0.0
  %955 = vmatpush.msra.mxu0 0.0
  %956 = vmatpush.msra.mxu0 0.0
  %957 = vmatpush.msra.mxu0 0.0
  %958 = vmatpush.msra.mxu0 0.0
  %959 = vmatpush.msra.mxu0 0.0
  %960 = vmatpush.msra.mxu0 0.0
  %961 = vmatpush.msra.mxu0 0.0
  %962 = vmatpush.msra.mxu0 0.0
  %963 = vmatpush.msra.mxu0 0.0
  %964 = vmatpush.msra.mxu0 0.0
  %965 = vmatpush.msra.mxu0 %v857
  %966 = vmatpush.msra.mxu0 %v856
  %967 = vmatmul.f32.gmra.mxu0 %v858
  %v968 = vpop.f32.mrf.mxu0
  %v969 = vadd.f32 %v904, %v968
  %970 = vmatmul.f32.gmra.mxu0 %v860
  %v971 = vpop.f32.mrf.mxu0
  %v972 = vadd.f32 %v907, %v971
  %973 = vmatmul.f32.gmra.mxu0 %v862
  %v974 = vpop.f32.mrf.mxu0
  %v975 = vadd.f32 %v910, %v974
  %976 = vmatmul.f32.gmra.mxu0 %v864
  %v977 = vpop.f32.mrf.mxu0
  %v978 = vadd.f32 %v913, %v977
  %979 = vmatmul.f32.gmra.mxu0 %v866
  %v980 = vpop.f32.mrf.mxu0
  %v981 = vadd.f32 %v916, %v980
  %982 = vmatmul.f32.gmra.mxu0 %v868
  %v983 = vpop.f32.mrf.mxu0
  %v984 = vadd.f32 %v919, %v983
  %985 = vmatmul.f32.gmra.mxu0 %v870
  %v986 = vpop.f32.mrf.mxu0
  %v987 = vadd.f32 %v922, %v986
  %988 = vmatmul.f32.gmra.mxu0 %v870
  %v989 = vpop.f32.mrf.mxu0
  %v990 = vadd.f32 %v925, %v989
  %991 = vmatmul.f32.gmra.mxu0 %v872
  %v992 = vpop.f32.mrf.mxu0
  %v993 = vadd.f32 %v928, %v992
  %994 = vmatmul.f32.gmra.mxu0 %v874
  %v995 = vpop.f32.mrf.mxu0
  %v996 = vadd.f32 %v931, %v995
  %997 = vmatmul.f32.gmra.mxu0 %v876
  %v998 = vpop.f32.mrf.mxu0
  %v999 = vadd.f32 %v934, %v998
  %1000 = vmatmul.f32.gmra.mxu0 %v878
  %v1001 = vpop.f32.mrf.mxu0
  %v1002 = vadd.f32 %v937, %v1001
  %1003 = vmatmul.f32.gmra.mxu0 %v880
  %v1004 = vpop.f32.mrf.mxu0
  %v1005 = vadd.f32 %v940, %v1004
  %1006 = vmatmul.f32.gmra.mxu0 %v882
  %v1007 = vpop.f32.mrf.mxu0
  %v1008 = vadd.f32 %v943, %v1007
  %1009 = vmatmul.f32.gmra.mxu0 %v884
  %v1010 = vpop.f32.mrf.mxu0
  %v1011 = vadd.f32 %v946, %v1010
  %1012 = vmatmul.f32.gmra.mxu0 %v884
  %v1013 = vpop.f32.mrf.mxu0
  %v1014 = vadd.f32 %v949, %v1013
  %1015 = vdwg.mxu0
  %1016 = vst.msk [vmem:[%s4] sm:$0xff] %vm41, %v969
  %1017 = vst.msk [vmem:[%s4 + $0x8] sm:$0xff] %vm41, %v972
  %1018 = vst.msk [vmem:[%s4 + $0x10] sm:$0xff] %vm41, %v975
  %1019 = vst.msk [vmem:[%s4 + $0x18] sm:$0xff] %vm41, %v978
  %1020 = vst.msk [vmem:[%s4 + $0x20] sm:$0xff] %vm41, %v981
  %1021 = vst.msk [vmem:[%s4 + $0x28] sm:$0xff] %vm41, %v984
  %1022 = vst.msk [vmem:[%s4 + $0x30] sm:$0xff] %vm41, %v987
  %1023 = vst.msk [vmem:[%s4 + $0x38] sm:$0xff] %vm41, %v990
  %1024 = vst.msk [vmem:[%s4 + $0x40] sm:$0xff] %vm41, %v993
  %1025 = vst.msk [vmem:[%s4 + $0x48] sm:$0xff] %vm41, %v996
  %1026 = vst.msk [vmem:[%s4 + $0x50] sm:$0xff] %vm41, %v999
  %1027 = vst.msk [vmem:[%s4 + $0x58] sm:$0xff] %vm41, %v1002
  %1028 = vst.msk [vmem:[%s4 + $0x60] sm:$0xff] %vm41, %v1005
  %1029 = vst.msk [vmem:[%s4 + $0x68] sm:$0xff] %vm41, %v1008
  %1030 = vst.msk [vmem:[%s4 + $0x70] sm:$0xff] %vm41, %v1011
  %1031 = vst.msk [vmem:[%s4 + $0x78] sm:$0xff] %vm41, %v1014
  %v1032 = vsel %vm41, %v969, 0.0
  %v1033 = vsel %vm41, %v972, 0.0
  %v1034 = vadd.f32 %v1032, %v1033
  %v1035 = vsel %vm41, %v975, 0.0
  %v1036 = vadd.f32 %v1034, %v1035
  %v1037 = vsel %vm41, %v978, 0.0
  %v1038 = vadd.f32 %v1036, %v1037
  %v1039 = vsel %vm41, %v981, 0.0
  %v1040 = vadd.f32 %v1038, %v1039
  %v1041 = vsel %vm41, %v984, 0.0
  %v1042 = vadd.f32 %v1040, %v1041
  %v1043 = vsel %vm41, %v987, 0.0
  %v1044 = vadd.f32 %v1042, %v1043
  %v1045 = vsel %vm41, %v990, 0.0
  %v1046 = vadd.f32 %v1044, %v1045
  %v1047 = vsel %vm41, %v993, 0.0
  %v1048 = vadd.f32 %v1046, %v1047
  %v1049 = vsel %vm41, %v996, 0.0
  %v1050 = vadd.f32 %v1048, %v1049
  %v1051 = vsel %vm41, %v999, 0.0
  %v1052 = vadd.f32 %v1050, %v1051
  %v1053 = vsel %vm41, %v1002, 0.0
  %v1054 = vadd.f32 %v1052, %v1053
  %v1055 = vsel %vm41, %v1005, 0.0
  %v1056 = vadd.f32 %v1054, %v1055
  %v1057 = vsel %vm41, %v1008, 0.0
  %v1058 = vadd.f32 %v1056, %v1057
  %v1059 = vsel %vm41, %v1011, 0.0
  %v1060 = vadd.f32 %v1058, %v1059
  %v1061 = vsel %vm41, %v1014, 0.0
  %v1062 = vadd.f32 %v1060, %v1061
  %v1063 = vrot.slane %v1062, 4
  %v1064 = vadd.f32 %v1062, %v1063
  %v1065 = vrot.slane %v1064, 2
  %v1066 = vadd.f32 %v1064, %v1065
  %v1067 = vrot.slane %v1066, 1
  %v1068 = vadd.f32 %v1066, %v1067
  %v1069 = vmul.f32 %v969, %v969
  %v1070 = vmul.f32 %v972, %v972
  %v1071 = vmul.f32 %v975, %v975
  %v1072 = vmul.f32 %v978, %v978
  %v1073 = vmul.f32 %v981, %v981
  %v1074 = vmul.f32 %v984, %v984
  %v1075 = vmul.f32 %v987, %v987
  %v1076 = vmul.f32 %v990, %v990
  %v1077 = vmul.f32 %v993, %v993
  %v1078 = vmul.f32 %v996, %v996
  %v1079 = vmul.f32 %v999, %v999
  %v1080 = vmul.f32 %v1002, %v1002
  %v1081 = vmul.f32 %v1005, %v1005
  %v1082 = vmul.f32 %v1008, %v1008
  %v1083 = vmul.f32 %v1011, %v1011
  %v1084 = vmul.f32 %v1014, %v1014
  %v1085 = vsel %vm41, %v1069, 0.0
  %v1086 = vsel %vm41, %v1070, 0.0
  %v1087 = vadd.f32 %v1085, %v1086
  %v1088 = vsel %vm41, %v1071, 0.0
  %v1089 = vadd.f32 %v1087, %v1088
  %v1090 = vsel %vm41, %v1072, 0.0
  %v1091 = vadd.f32 %v1089, %v1090
  %v1092 = vsel %vm41, %v1073, 0.0
  %v1093 = vadd.f32 %v1091, %v1092
  %v1094 = vsel %vm41, %v1074, 0.0
  %v1095 = vadd.f32 %v1093, %v1094
  %v1096 = vsel %vm41, %v1075, 0.0
  %v1097 = vadd.f32 %v1095, %v1096
  %v1098 = vsel %vm41, %v1076, 0.0
  %v1099 = vadd.f32 %v1097, %v1098
  %v1100 = vsel %vm41, %v1077, 0.0
  %v1101 = vadd.f32 %v1099, %v1100
  %v1102 = vsel %vm41, %v1078, 0.0
  %v1103 = vadd.f32 %v1101, %v1102
  %v1104 = vsel %vm41, %v1079, 0.0
  %v1105 = vadd.f32 %v1103, %v1104
  %v1106 = vsel %vm41, %v1080, 0.0
  %v1107 = vadd.f32 %v1105, %v1106
  %v1108 = vsel %vm41, %v1081, 0.0
  %v1109 = vadd.f32 %v1107, %v1108
  %v1110 = vsel %vm41, %v1082, 0.0
  %v1111 = vadd.f32 %v1109, %v1110
  %v1112 = vsel %vm41, %v1083, 0.0
  %v1113 = vadd.f32 %v1111, %v1112
  %v1114 = vsel %vm41, %v1084, 0.0
  %v1115 = vadd.f32 %v1113, %v1114
  %v1116 = vrot.slane %v1115, 4
  %v1117 = vadd.f32 %v1115, %v1116
  %v1118 = vrot.slane %v1117, 2
  %v1119 = vadd.f32 %v1117, %v1118
  %v1120 = vrot.slane %v1119, 1
  %v1121 = vadd.f32 %v1119, %v1120
  %1138 = vrot.lane.b32.xlu0 %v969, 120
  %v1139 = vpop.permute.xlu0 %1138
  %1140 = vrot.lane.b32.xlu0 %v972, 120
  %v1141 = vpop.permute.xlu0 %1140
  %1142 = vrot.lane.b32.xlu0 %v975, 120
  %v1143 = vpop.permute.xlu0 %1142
  %1144 = vrot.lane.b32.xlu0 %v978, 120
  %v1145 = vpop.permute.xlu0 %1144
  %1146 = vrot.lane.b32.xlu0 %v981, 120
  %v1147 = vpop.permute.xlu0 %1146
  %1148 = vrot.lane.b32.xlu0 %v984, 120
  %v1149 = vpop.permute.xlu0 %1148
  %1150 = vrot.lane.b32.xlu0 %v987, 120
  %v1151 = vpop.permute.xlu0 %1150
  %1152 = vrot.lane.b32.xlu0 %v990, 120
  %v1153 = vpop.permute.xlu0 %1152
  %1154 = vrot.lane.b32.xlu0 %v993, 120
  %v1155 = vpop.permute.xlu0 %1154
  %1156 = vrot.lane.b32.xlu0 %v996, 120
  %v1157 = vpop.permute.xlu0 %1156
  %1158 = vrot.lane.b32.xlu0 %v999, 120
  %v1159 = vpop.permute.xlu0 %1158
  %1160 = vrot.lane.b32.xlu0 %v1002, 120
  %v1161 = vpop.permute.xlu0 %1160
  %1162 = vrot.lane.b32.xlu0 %v1005, 120
  %v1163 = vpop.permute.xlu0 %1162
  %1164 = vrot.lane.b32.xlu0 %v1008, 120
  %v1165 = vpop.permute.xlu0 %1164
  %1166 = vrot.lane.b32.xlu0 %v1011, 120
  %v1167 = vpop.permute.xlu0 %1166
  %1168 = vrot.lane.b32.xlu0 %v1014, 120
  %v1169 = vpop.permute.xlu0 %1168
  %v1186 = vmul.f32 %v969, %v1139
  %v1187 = vmul.f32 %v972, %v1141
  %v1188 = vmul.f32 %v975, %v1143
  %v1189 = vmul.f32 %v978, %v1145
  %v1190 = vmul.f32 %v981, %v1147
  %v1191 = vmul.f32 %v984, %v1149
  %v1192 = vmul.f32 %v987, %v1151
  %v1193 = vmul.f32 %v990, %v1153
  %v1194 = vmul.f32 %v993, %v1155
  %v1195 = vmul.f32 %v996, %v1157
  %v1196 = vmul.f32 %v999, %v1159
  %v1197 = vmul.f32 %v1002, %v1161
  %v1198 = vmul.f32 %v1005, %v1163
  %v1199 = vmul.f32 %v1008, %v1165
  %v1200 = vmul.f32 %v1011, %v1167
  %v1201 = vmul.f32 %v1014, %v1169
  %vm1202 = vcmask 64512
  %v1203 = vsel %vm1202, %v1186, 0.0
  %v1204 = vsel %vm1202, %v1187, 0.0
  %v1205 = vadd.f32 %v1203, %v1204
  %v1206 = vsel %vm1202, %v1188, 0.0
  %v1207 = vadd.f32 %v1205, %v1206
  %v1208 = vsel %vm1202, %v1189, 0.0
  %v1209 = vadd.f32 %v1207, %v1208
  %v1210 = vsel %vm1202, %v1190, 0.0
  %v1211 = vadd.f32 %v1209, %v1210
  %v1212 = vsel %vm1202, %v1191, 0.0
  %v1213 = vadd.f32 %v1211, %v1212
  %v1214 = vsel %vm1202, %v1192, 0.0
  %v1215 = vadd.f32 %v1213, %v1214
  %v1216 = vsel %vm1202, %v1193, 0.0
  %v1217 = vadd.f32 %v1215, %v1216
  %v1218 = vsel %vm1202, %v1194, 0.0
  %v1219 = vadd.f32 %v1217, %v1218
  %v1220 = vsel %vm1202, %v1195, 0.0
  %v1221 = vadd.f32 %v1219, %v1220
  %v1222 = vsel %vm1202, %v1196, 0.0
  %v1223 = vadd.f32 %v1221, %v1222
  %v1224 = vsel %vm1202, %v1197, 0.0
  %v1225 = vadd.f32 %v1223, %v1224
  %v1226 = vsel %vm1202, %v1198, 0.0
  %v1227 = vadd.f32 %v1225, %v1226
  %v1228 = vsel %vm1202, %v1199, 0.0
  %v1229 = vadd.f32 %v1227, %v1228
  %v1230 = vsel %vm1202, %v1200, 0.0
  %v1231 = vadd.f32 %v1229, %v1230
  %v1232 = vsel %vm1202, %v1201, 0.0
  %v1233 = vadd.f32 %v1231, %v1232
  %v1234 = vrot.slane %v1233, 4
  %v1235 = vadd.f32 %v1233, %v1234
  %v1236 = vrot.slane %v1235, 2
  %v1237 = vadd.f32 %v1235, %v1236
  %v1238 = vrot.slane %v1237, 1
  %v1239 = vadd.f32 %v1237, %v1238
  %1241 = vrot.lane.b32.xlu0 %v1239, 8
  %v1242 = vpop.permute.xlu0 %1241
  %v1244 = vsel %vm1202, %v1239, %v1242
  %v1246 = vrot.slane %v1244, 6
  %v1248 = vsel %vm251, %v1068, %v1121
  %vm1249 = vcmask 1041408
  %v1250 = vsel %vm1249, %v1248, %v1246
  %vm1251 = vcmask 124928
  %1252 = vst.msk [vmem:[%s5] sm:$0x7] %vm1251, %v1250
  // Predicated region
  $region18: #{down_forward.4} parent=0 // pred_check
    _
  $region19: #{down_forward.4} parent=0 // pred_check_branch
    %1254 = sbr.rel (0) target = $region21
  $region20: #{down_forward.4} parent=0 // pred_region
    _
  $region21: #{down_forward.4} parent=0 // pred_fallthru
    _
  // Predicated region
  $region22: #{down_forward.4} parent=0 // pred_check
    _
  $region23: #{down_forward.4} parent=0 // pred_check_branch
    %1256 = sbr.rel (0) target = $region25
  $region24: #{down_forward.4} parent=0 // pred_region
    _
  $region25: #{down_forward.4} parent=0 // pred_fallthru
    _
  // Predicated region
  $region26: #{down_forward.4} parent=0 // pred_check
    _
  $region27: #{down_forward.4} parent=0 // pred_check_branch
    %1258 = sbr.rel (0) target = $region29
  $region28: #{down_forward.4} parent=0 // pred_region
    _
  $region29: #{down_forward.4} parent=0 // pred_fallthru
    _
  // Predicated region
  $region30: #{down_forward.4} parent=0 // pred_check
    _
  $region31: #{down_forward.4} parent=0 // pred_check_branch
    %1260 = sbr.rel (0) target = $region33
  $region32: #{down_forward.4} parent=0 // pred_region
    _
  $region33: #{down_forward.4} parent=0 // pred_fallthru
    _

</llo_original>
